<compile_context>
chip_gen: v5e
topology: v5e:2x2
jax: 0.10.0
libtpu: 0.0.40
codegen_flags: <defaults>
</compile_context>

<pallas_src>
import functools

import jax
import jax.numpy as jnp
from jax import lax
from jax.experimental import pallas as pl
from jax.experimental.pallas import tpu as pltpu


def _conv3x3_im2col_kernel(x_ref, w_ref, ml_ref, mr_ref, o_ref,
                           xs_ref, stage_ref, *, W, tile_h):
    """Grid = (B, H // tile_h): one row strip of one batch element per step.

    x_ref:     (1, H*W, Cin)             whole image (token-major), resident across strips
    w_ref:     (9*Cin, Cout)             im2col-folded weights, K index = (kh*3 + kw)*Cin + c
    ml_ref:    (tile_h*W, Cin)           0/1 mask zeroing w == 0   rows (kw == 0 taps)
    mr_ref:    (tile_h*W, Cin)           0/1 mask zeroing w == W-1 rows (kw == 2 taps)
    o_ref:     (1, tile_h*W, Cout)       lane-dense conv output slab for this strip
    xs_ref:    (tile_h*W + 2*W + 2, Cin) VMEM: flat strip + top/bottom halo rows + 1-row guards
    stage_ref: (tile_h*W, 9*Cin)         VMEM: im2col staging buffer (K packed along lanes)
    """
    Cin = x_ref.shape[2]
    M = tile_h * W                              # matmul M dim = tokens in the strip
    t = pl.program_id(1)
    n_t = pl.num_programs(1)
    m0 = pl.multiple_of(t * M, M)               # first flattened token of this strip

    # ---- Stage the strip (+ 1-row halos) into the flat padded scratch (cast to bf16). ----
    # Halo-only zeroing: interior rows are overwritten, only guards / boundary halos get
    # explicit zeros.  The scratch persists across grid steps, so every border row is
    # rewritten (zeros or data) every step.
    zrow = jnp.zeros((1, Cin), xs_ref.dtype)
    xs_ref[0:1, :] = zrow                                   # front guard (kh=0, kw=0 corner)
    xs_ref[M + 2 * W + 1:M + 2 * W + 2, :] = zrow           # back guard  (kh=2, kw=2 corner)

    # Interior rows (always valid).
    xs_ref[1 + W:1 + W + M, :] = x_ref[0, pl.ds(m0, M), :].astype(xs_ref.dtype)

    # Top halo row: image row above the strip, or zeros for the first strip.
    @pl.when(t == 0)
    def _():
        xs_ref[1:1 + W, :] = jnp.zeros((W, Cin), xs_ref.dtype)

    @pl.when(t > 0)
    def _():
        xs_ref[1:1 + W, :] = x_ref[0, pl.ds(m0 - W, W), :].astype(xs_ref.dtype)

    # Bottom halo row: image row below the strip, or zeros for the last strip.
    @pl.when(t == n_t - 1)
    def _():
        xs_ref[1 + W + M:1 + 2 * W + M, :] = jnp.zeros((W, Cin), xs_ref.dtype)

    @pl.when(t < n_t - 1)
    def _():
        xs_ref[1 + W + M:1 + 2 * W + M, :] = x_ref[0, pl.ds(m0 + M, W), :].astype(xs_ref.dtype)

    # ---- im2col staging: pack all 9 taps along lanes (K = 9*Cin). ----
    # In flat coordinates the tap (kh, kw) value for output token m is xs[m + kh*W + kw];
    # the column wrap-around of the kw=0 / kw=2 taps is zeroed with the 0/1 masks.
    for kh in range(3):
        for kw in range(3):
            start = kh * W + kw                             # static slice start
            tap = xs_ref[start:start + M, :]
            if kw == 0:
                tap = tap * ml_ref[...]
            elif kw == 2:
                tap = tap * mr_ref[...]
            off = (kh * 3 + kw) * Cin
            stage_ref[:, off:off + Cin] = tap

    # ---- Single MXU matmul per strip: (M, 9*Cin) @ (9*Cin, Cout), f32 accumulation. ----
    acc = jnp.dot(stage_ref[...], w_ref[...], preferred_element_type=jnp.float32)

    # Single lane-dense store: Cout = 4*n_feat (128 in the test) -> unmasked full-lane vst.
    o_ref[0] = acc.astype(o_ref.dtype)


def upsample_1(x, w_hwio, H, W, *, compute_dtype=jnp.bfloat16, tile_h=None):
    """Pallas implementation of Upsample_1.forward.

    x:      (B, H*W, C)        C == n_feat
    w_hwio: (3, 3, C, 4*C)     HWIO weights (from PyTorch OIHW: w.transpose(2, 3, 1, 0))
    returns (B, C, 2*H, 2*W)   NCHW, matching the PyTorch module.
    """
    B, L, Cin = x.shape
    assert L == H * W, (L, H, W)
    Cout = w_hwio.shape[-1]
    assert w_hwio.shape == (3, 3, Cin, Cout) and Cout == 4 * Cin, (w_hwio.shape, Cin)

    # Row-strip tiling: whole image for small H, 16-row strips for realistic resolutions.
    if tile_h is None:
        tile_h = H if (H <= 16 or H % 16 != 0) else 16
    assert H % tile_h == 0, (H, tile_h)
    n_strips = H // tile_h
    M = tile_h * W
    assert M % 8 == 0, "tile_h * W must be a multiple of 8 (sublane tiling)"

    # Weight prep: fold (kh, kw, cin) into one K = 9*Cin contraction dim, bf16 for the MXU.
    w_k = w_hwio.reshape(9 * Cin, Cout).astype(compute_dtype)

    # 0/1 masks that zero the column wrap-around of the kw=0 / kw=2 taps.
    w_pos = jnp.arange(M, dtype=jnp.int32) % W
    mask_l = jnp.broadcast_to((w_pos != 0)[:, None], (M, Cin)).astype(compute_dtype)
    mask_r = jnp.broadcast_to((w_pos != W - 1)[:, None], (M, Cin)).astype(compute_dtype)

    out_dtype = x.dtype
    cd_size = jnp.dtype(compute_dtype).itemsize
    cost = pl.CostEstimate(
        flops=2 * B * H * W * 9 * Cin * Cout,
        transcendentals=0,
        bytes_accessed=(B * L * Cin * x.dtype.itemsize
                        + 9 * Cin * Cout * cd_size
                        + 2 * M * Cin * cd_size
                        + B * L * Cout * jnp.dtype(out_dtype).itemsize),
    )

    kernel = functools.partial(_conv3x3_im2col_kernel, W=W, tile_h=tile_h)

    conv = pl.pallas_call(
        kernel,
        out_shape=jax.ShapeDtypeStruct((B, H * W, Cout), out_dtype),
        grid_spec=pltpu.PrefetchScalarGridSpec(
            num_scalar_prefetch=0,
            grid=(B, n_strips),
            in_specs=[
                # Whole image resident across the strip axis (halos sliced in-kernel).
                pl.BlockSpec((1, H * W, Cin), lambda b, t: (b, 0, 0)),
                pl.BlockSpec((9 * Cin, Cout), lambda b, t: (0, 0)),
                pl.BlockSpec((M, Cin), lambda b, t: (0, 0)),
                pl.BlockSpec((M, Cin), lambda b, t: (0, 0)),
            ],
            out_specs=pl.BlockSpec((1, M, Cout), lambda b, t: (b, t, 0)),
            scratch_shapes=[
                pltpu.VMEM((M + 2 * W + 2, Cin), compute_dtype),   # flat padded strip
                pltpu.VMEM((M, 9 * Cin), compute_dtype),           # im2col staging buffer
            ],
        ),
        compiler_params=pltpu.CompilerParams(
            dimension_semantics=("parallel", "parallel"),
            vmem_limit_bytes=32 * 1024 * 1024,
        ),
        cost_estimate=cost,
    )(x, w_k, mask_l, mask_r)

    # PixelShuffle(2): conv channel o = c*4 + i*2 + j goes to out[b, c, 2h+i, 2w+j].
    # (B, H*W, 4C) -> (B, H, W, C, 2, 2) is metadata-only; one fused XLA transpose does the
    # 2x2 interleave + NCHW conversion; the final reshape is metadata-only again.
    y = conv.reshape(B, H, W, Cin, 2, 2)
    y = jnp.transpose(y, (0, 3, 1, 4, 2, 5))      # (B, C, H, 2, W, 2)
    return y.reshape(B, Cin, 2 * H, 2 * W)


def _reference(x, w_hwio, H, W, compute_dtype=jnp.bfloat16):
    """Pure-JAX reference with the same precision policy (bf16 inputs, f32 accumulation)."""
    B, L, Cin = x.shape
    Cout = w_hwio.shape[-1]
    C = Cout // 4
    x_nhwc = x.reshape(B, H, W, Cin).astype(compute_dtype)
    y = lax.conv_general_dilated(
        x_nhwc, w_hwio.astype(compute_dtype),
        window_strides=(1, 1), padding="SAME",
        dimension_numbers=("NHWC", "HWIO", "NHWC"),
        preferred_element_type=jnp.float32,
    ).astype(x.dtype)
    y = jnp.transpose(y, (0, 3, 1, 2))            # (B, 4C, H, W)  NCHW conv output
    y = y.reshape(B, C, 2, 2, H, W)               # (b, c, i, j, h, w)
    y = jnp.transpose(y, (0, 1, 4, 2, 5, 3))      # (b, c, h, i, w, j)
    return y.reshape(B, C, 2 * H, 2 * W)


if __name__ == "__main__":
    # Small shapes consistent with Upsample_1: n_feat=32 so conv out channels = 128 (lane-dense).
    B = 2
    n_feat = 32
    H = W = 8
    L = H * W
    Cout = 4 * n_feat

    key = jax.random.PRNGKey(0)
    kx, kw = jax.random.split(key, 2)

    x = jax.random.normal(kx, (B, L, n_feat), dtype=jnp.float32)
    # Deterministic synthetic Conv2d(n_feat, 4*n_feat, 3, bias=False) weights, stored HWIO.
    w_hwio = jax.random.normal(kw, (3, 3, n_feat, Cout), dtype=jnp.float32) * 0.05

    fwd = jax.jit(upsample_1, static_argnums=(2, 3))
    out = jax.block_until_ready(fwd(x, w_hwio, H, W))

    ref = _reference(x, w_hwio, H, W)
    assert out.shape == (B, n_feat, 2 * H, 2 * W), out.shape
    err = float(jnp.max(jnp.abs(out - ref)))
    assert err < 5e-3, err

    print("KERNEL_OK")
</pallas_src>

<mosaic_0001>
module attributes {stable_mosaic.version = 11 : i64} {
  func.func @_conv3x3_im2col_kernel(%arg0: i32, %arg1: i32, %arg2: memref<1x64x32xf32, #tpu.memory_space<vmem>>, %arg3: memref<288x128xbf16, #tpu.memory_space<vmem>>, %arg4: memref<64x32xbf16, #tpu.memory_space<vmem>>, %arg5: memref<64x32xbf16, #tpu.memory_space<vmem>>, %arg6: memref<1x64x128xf32, #tpu.memory_space<vmem>>, %arg7: memref<82x32xbf16, #tpu.memory_space<vmem>>, %arg8: memref<64x288xbf16, #tpu.memory_space<vmem>>) attributes {dimension_semantics = [#tpu.dimension_semantics<parallel>, #tpu.dimension_semantics<parallel>], iteration_bounds = array<i64: 2, 1>, scalar_prefetch = 0 : i64, scratch_operands = 2 : i64, tpu.core_type = #tpu.core_type<tc>, window_params = [{transform_indices = @transform_0, window_bounds = array<i64: 1, 64, 32>}, {pipeline_mode = #tpu.pipeline_mode<synchronous>, transform_indices = @transform_1, window_bounds = array<i64: 288, 128>}, {pipeline_mode = #tpu.pipeline_mode<synchronous>, transform_indices = @transform_2, window_bounds = array<i64: 64, 32>}, {pipeline_mode = #tpu.pipeline_mode<synchronous>, transform_indices = @transform_3, window_bounds = array<i64: 64, 32>}, {transform_indices = @transform_4, window_bounds = array<i64: 1, 64, 128>}]} {
    %c64_i32 = arith.constant 64 : i32
    %0 = arith.muli %arg1, %c64_i32 : i32
    %1 = tpu.assume_multiple %0, 64 : i32
    %cst = arith.constant 0.000000e+00 : bf16
    %2 = vector.broadcast %cst : bf16 to vector<1x32xbf16>
    %c0 = arith.constant 0 : index
    %c0_0 = arith.constant 0 : index
    %3 = vector.load %arg7[%c0, %c0_0] : memref<82x32xbf16, #tpu.memory_space<vmem>>, vector<1x32xbf16>
    tpu.vector_store %arg7[%c0, %c0_0], %2 {strides = array<i32>} : memref<82x32xbf16, #tpu.memory_space<vmem>>, vector<1x32xbf16>,
    %c81 = arith.constant 81 : index
    %c0_1 = arith.constant 0 : index
    %4 = vector.load %arg7[%c81, %c0_1] : memref<82x32xbf16, #tpu.memory_space<vmem>>, vector<1x32xbf16>
    tpu.vector_store %arg7[%c81, %c0_1], %2 {strides = array<i32>} : memref<82x32xbf16, #tpu.memory_space<vmem>>, vector<1x32xbf16>,
    %c0_2 = arith.constant 0 : index
    %5 = arith.index_cast %1 : i32 to index
    %c0_3 = arith.constant 0 : index
    %6 = vector.load %arg2[%c0_2, %5, %c0_3] : memref<1x64x32xf32, #tpu.memory_space<vmem>>, vector<1x64x32xf32>
    %7 = vector.shape_cast %6 : vector<1x64x32xf32> to vector<64x32xf32>
    %8 = arith.truncf %7 : vector<64x32xf32> to vector<64x32xbf16>
    %c9 = arith.constant 9 : index
    %c0_4 = arith.constant 0 : index
    %9 = vector.load %arg7[%c9, %c0_4] : memref<82x32xbf16, #tpu.memory_space<vmem>>, vector<64x32xbf16>
    tpu.vector_store %arg7[%c9, %c0_4], %8 {strides = array<i32>} : memref<82x32xbf16, #tpu.memory_space<vmem>>, vector<64x32xbf16>,
    %c0_i32 = arith.constant 0 : i32
    %10 = arith.cmpi eq, %arg1, %c0_i32 : i32
    %11 = arith.extui %10 : i1 to i32
    %c0_i32_5 = arith.constant 0 : i32
    %12 = arith.cmpi ne, %11, %c0_i32_5 : i32
    scf.if %12 {
      %cst_53 = arith.constant 0.000000e+00 : bf16
      %58 = vector.broadcast %cst_53 : bf16 to vector<8x32xbf16>
      %c1_54 = arith.constant 1 : index
      %c0_55 = arith.constant 0 : index
      %59 = vector.load %arg7[%c1_54, %c0_55] : memref<82x32xbf16, #tpu.memory_space<vmem>>, vector<8x32xbf16>
      tpu.vector_store %arg7[%c1_54, %c0_55], %58 {strides = array<i32>} : memref<82x32xbf16, #tpu.memory_space<vmem>>, vector<8x32xbf16>,
    } else {
    }
    %c0_i32_6 = arith.constant 0 : i32
    %13 = arith.cmpi sgt, %arg1, %c0_i32_6 : i32
    %14 = arith.extui %13 : i1 to i32
    %c0_i32_7 = arith.constant 0 : i32
    %15 = arith.cmpi ne, %14, %c0_i32_7 : i32
    scf.if %15 {
      %c8_i32 = arith.constant 8 : i32
      %58 = arith.subi %1, %c8_i32 : i32
      %c0_53 = arith.constant 0 : index
      %59 = arith.index_cast %58 : i32 to index
      %c0_54 = arith.constant 0 : index
      %60 = vector.load %arg2[%c0_53, %59, %c0_54] : memref<1x64x32xf32, #tpu.memory_space<vmem>>, vector<1x8x32xf32>
      %61 = vector.shape_cast %60 : vector<1x8x32xf32> to vector<8x32xf32>
      %62 = arith.truncf %61 : vector<8x32xf32> to vector<8x32xbf16>
      %c1_55 = arith.constant 1 : index
      %c0_56 = arith.constant 0 : index
      %63 = vector.load %arg7[%c1_55, %c0_56] : memref<82x32xbf16, #tpu.memory_space<vmem>>, vector<8x32xbf16>
      tpu.vector_store %arg7[%c1_55, %c0_56], %62 {strides = array<i32>} : memref<82x32xbf16, #tpu.memory_space<vmem>>, vector<8x32xbf16>,
    } else {
    }
    %c0_i32_8 = arith.constant 0 : i32
    %16 = arith.cmpi eq, %arg1, %c0_i32_8 : i32
    %17 = arith.extui %16 : i1 to i32
    %c0_i32_9 = arith.constant 0 : i32
    %18 = arith.cmpi ne, %17, %c0_i32_9 : i32
    scf.if %18 {
      %cst_53 = arith.constant 0.000000e+00 : bf16
      %58 = vector.broadcast %cst_53 : bf16 to vector<8x32xbf16>
      %c73 = arith.constant 73 : index
      %c0_54 = arith.constant 0 : index
      %59 = vector.load %arg7[%c73, %c0_54] : memref<82x32xbf16, #tpu.memory_space<vmem>>, vector<8x32xbf16>
      tpu.vector_store %arg7[%c73, %c0_54], %58 {strides = array<i32>} : memref<82x32xbf16, #tpu.memory_space<vmem>>, vector<8x32xbf16>,
    } else {
    }
    %c0_i32_10 = arith.constant 0 : i32
    %19 = arith.cmpi slt, %arg1, %c0_i32_10 : i32
    %20 = arith.extui %19 : i1 to i32
    %c0_i32_11 = arith.constant 0 : i32
    %21 = arith.cmpi ne, %20, %c0_i32_11 : i32
    scf.if %21 {
      %c64_i32_53 = arith.constant 64 : i32
      %58 = arith.addi %1, %c64_i32_53 : i32
      %c0_54 = arith.constant 0 : index
      %59 = arith.index_cast %58 : i32 to index
      %c0_55 = arith.constant 0 : index
      %60 = vector.load %arg2[%c0_54, %59, %c0_55] : memref<1x64x32xf32, #tpu.memory_space<vmem>>, vector<1x8x32xf32>
      %61 = vector.shape_cast %60 : vector<1x8x32xf32> to vector<8x32xf32>
      %62 = arith.truncf %61 : vector<8x32xf32> to vector<8x32xbf16>
      %c73 = arith.constant 73 : index
      %c0_56 = arith.constant 0 : index
      %63 = vector.load %arg7[%c73, %c0_56] : memref<82x32xbf16, #tpu.memory_space<vmem>>, vector<8x32xbf16>
      tpu.vector_store %arg7[%c73, %c0_56], %62 {strides = array<i32>} : memref<82x32xbf16, #tpu.memory_space<vmem>>, vector<8x32xbf16>,
    } else {
    }
    %c0_12 = arith.constant 0 : index
    %c0_13 = arith.constant 0 : index
    %22 = vector.load %arg7[%c0_12, %c0_13] : memref<82x32xbf16, #tpu.memory_space<vmem>>, vector<64x32xbf16>
    %c0_14 = arith.constant 0 : index
    %c0_15 = arith.constant 0 : index
    %23 = vector.load %arg4[%c0_14, %c0_15] : memref<64x32xbf16, #tpu.memory_space<vmem>>, vector<64x32xbf16>
    %24 = arith.mulf %22, %23 : vector<64x32xbf16>
    %c0_16 = arith.constant 0 : index
    %c0_17 = arith.constant 0 : index
    %25 = vector.load %arg8[%c0_16, %c0_17] : memref<64x288xbf16, #tpu.memory_space<vmem>>, vector<64x32xbf16>
    tpu.vector_store %arg8[%c0_16, %c0_17], %24 {strides = array<i32>} : memref<64x288xbf16, #tpu.memory_space<vmem>>, vector<64x32xbf16>,
    %c1 = arith.constant 1 : index
    %c0_18 = arith.constant 0 : index
    %26 = vector.load %arg7[%c1, %c0_18] : memref<82x32xbf16, #tpu.memory_space<vmem>>, vector<64x32xbf16>
    %c0_19 = arith.constant 0 : index
    %c32 = arith.constant 32 : index
    %27 = vector.load %arg8[%c0_19, %c32] : memref<64x288xbf16, #tpu.memory_space<vmem>>, vector<64x32xbf16>
    tpu.vector_store %arg8[%c0_19, %c32], %26 {strides = array<i32>} : memref<64x288xbf16, #tpu.memory_space<vmem>>, vector<64x32xbf16>,
    %c2 = arith.constant 2 : index
    %c0_20 = arith.constant 0 : index
    %28 = vector.load %arg7[%c2, %c0_20] : memref<82x32xbf16, #tpu.memory_space<vmem>>, vector<64x32xbf16>
    %c0_21 = arith.constant 0 : index
    %c0_22 = arith.constant 0 : index
    %29 = vector.load %arg5[%c0_21, %c0_22] : memref<64x32xbf16, #tpu.memory_space<vmem>>, vector<64x32xbf16>
    %30 = arith.mulf %28, %29 : vector<64x32xbf16>
    %c0_23 = arith.constant 0 : index
    %c64 = arith.constant 64 : index
    %31 = vector.load %arg8[%c0_23, %c64] : memref<64x288xbf16, #tpu.memory_space<vmem>>, vector<64x32xbf16>
    tpu.vector_store %arg8[%c0_23, %c64], %30 {strides = array<i32>} : memref<64x288xbf16, #tpu.memory_space<vmem>>, vector<64x32xbf16>,
    %c8 = arith.constant 8 : index
    %c0_24 = arith.constant 0 : index
    %32 = vector.load %arg7[%c8, %c0_24] : memref<82x32xbf16, #tpu.memory_space<vmem>>, vector<64x32xbf16>
    %c0_25 = arith.constant 0 : index
    %c0_26 = arith.constant 0 : index
    %33 = vector.load %arg4[%c0_25, %c0_26] : memref<64x32xbf16, #tpu.memory_space<vmem>>, vector<64x32xbf16>
    %34 = arith.mulf %32, %33 : vector<64x32xbf16>
    %c0_27 = arith.constant 0 : index
    %c96 = arith.constant 96 : index
    %35 = vector.load %arg8[%c0_27, %c96] : memref<64x288xbf16, #tpu.memory_space<vmem>>, vector<64x32xbf16>
    tpu.vector_store %arg8[%c0_27, %c96], %34 {strides = array<i32>} : memref<64x288xbf16, #tpu.memory_space<vmem>>, vector<64x32xbf16>,
    %c9_28 = arith.constant 9 : index
    %c0_29 = arith.constant 0 : index
    %36 = vector.load %arg7[%c9_28, %c0_29] : memref<82x32xbf16, #tpu.memory_space<vmem>>, vector<64x32xbf16>
    %c0_30 = arith.constant 0 : index
    %c128 = arith.constant 128 : index
    %37 = vector.load %arg8[%c0_30, %c128] : memref<64x288xbf16, #tpu.memory_space<vmem>>, vector<64x32xbf16>
    tpu.vector_store %arg8[%c0_30, %c128], %36 {strides = array<i32>} : memref<64x288xbf16, #tpu.memory_space<vmem>>, vector<64x32xbf16>,
    %c10 = arith.constant 10 : index
    %c0_31 = arith.constant 0 : index
    %38 = vector.load %arg7[%c10, %c0_31] : memref<82x32xbf16, #tpu.memory_space<vmem>>, vector<64x32xbf16>
    %c0_32 = arith.constant 0 : index
    %c0_33 = arith.constant 0 : index
    %39 = vector.load %arg5[%c0_32, %c0_33] : memref<64x32xbf16, #tpu.memory_space<vmem>>, vector<64x32xbf16>
    %40 = arith.mulf %38, %39 : vector<64x32xbf16>
    %c0_34 = arith.constant 0 : index
    %c160 = arith.constant 160 : index
    %41 = vector.load %arg8[%c0_34, %c160] : memref<64x288xbf16, #tpu.memory_space<vmem>>, vector<64x32xbf16>
    tpu.vector_store %arg8[%c0_34, %c160], %40 {strides = array<i32>} : memref<64x288xbf16, #tpu.memory_space<vmem>>, vector<64x32xbf16>,
    %c16 = arith.constant 16 : index
    %c0_35 = arith.constant 0 : index
    %42 = vector.load %arg7[%c16, %c0_35] : memref<82x32xbf16, #tpu.memory_space<vmem>>, vector<64x32xbf16>
    %c0_36 = arith.constant 0 : index
    %c0_37 = arith.constant 0 : index
    %43 = vector.load %arg4[%c0_36, %c0_37] : memref<64x32xbf16, #tpu.memory_space<vmem>>, vector<64x32xbf16>
    %44 = arith.mulf %42, %43 : vector<64x32xbf16>
    %c0_38 = arith.constant 0 : index
    %c192 = arith.constant 192 : index
    %45 = vector.load %arg8[%c0_38, %c192] : memref<64x288xbf16, #tpu.memory_space<vmem>>, vector<64x32xbf16>
    tpu.vector_store %arg8[%c0_38, %c192], %44 {strides = array<i32>} : memref<64x288xbf16, #tpu.memory_space<vmem>>, vector<64x32xbf16>,
    %c17 = arith.constant 17 : index
    %c0_39 = arith.constant 0 : index
    %46 = vector.load %arg7[%c17, %c0_39] : memref<82x32xbf16, #tpu.memory_space<vmem>>, vector<64x32xbf16>
    %c0_40 = arith.constant 0 : index
    %c224 = arith.constant 224 : index
    %47 = vector.load %arg8[%c0_40, %c224] : memref<64x288xbf16, #tpu.memory_space<vmem>>, vector<64x32xbf16>
    tpu.vector_store %arg8[%c0_40, %c224], %46 {strides = array<i32>} : memref<64x288xbf16, #tpu.memory_space<vmem>>, vector<64x32xbf16>,
    %c18 = arith.constant 18 : index
    %c0_41 = arith.constant 0 : index
    %48 = vector.load %arg7[%c18, %c0_41] : memref<82x32xbf16, #tpu.memory_space<vmem>>, vector<64x32xbf16>
    %c0_42 = arith.constant 0 : index
    %c0_43 = arith.constant 0 : index
    %49 = vector.load %arg5[%c0_42, %c0_43] : memref<64x32xbf16, #tpu.memory_space<vmem>>, vector<64x32xbf16>
    %50 = arith.mulf %48, %49 : vector<64x32xbf16>
    %c0_44 = arith.constant 0 : index
    %c256 = arith.constant 256 : index
    %51 = vector.load %arg8[%c0_44, %c256] : memref<64x288xbf16, #tpu.memory_space<vmem>>, vector<64x32xbf16>
    tpu.vector_store %arg8[%c0_44, %c256], %50 {strides = array<i32>} : memref<64x288xbf16, #tpu.memory_space<vmem>>, vector<64x32xbf16>,
    %c0_45 = arith.constant 0 : index
    %c0_46 = arith.constant 0 : index
    %52 = vector.load %arg8[%c0_45, %c0_46] : memref<64x288xbf16, #tpu.memory_space<vmem>>, vector<64x288xbf16>
    %c0_47 = arith.constant 0 : index
    %c0_48 = arith.constant 0 : index
    %53 = vector.load %arg3[%c0_47, %c0_48] : memref<288x128xbf16, #tpu.memory_space<vmem>>, vector<288x128xbf16>
    %cst_49 = arith.constant dense<0.000000e+00> : vector<64x128xf32>
    %54 = tpu.matmul %52, %53, %cst_49 {dimension_numbers = #tpu.dot_dimension_numbers<[1], [0], [0], [1], [0, 0, 1, 1], [], []>} : vector<64x288xbf16>, vector<288x128xbf16>, vector<64x128xf32> -> vector<64x128xf32>
    %c0_50 = arith.constant 0 : index
    %c0_51 = arith.constant 0 : index
    %c0_52 = arith.constant 0 : index
    %55 = vector.load %arg6[%c0_50, %c0_51, %c0_52] : memref<1x64x128xf32, #tpu.memory_space<vmem>>, vector<1x64x128xf32>
    %56 = vector.shape_cast %55 : vector<1x64x128xf32> to vector<64x128xf32>
    %57 = vector.shape_cast %54 : vector<64x128xf32> to vector<1x64x128xf32>
    tpu.vector_store %arg6[%c0_50, %c0_51, %c0_52], %57 {strides = array<i32>} : memref<1x64x128xf32, #tpu.memory_space<vmem>>, vector<1x64x128xf32>,
    return
  }
  func.func @transform_0(%arg0: i32, %arg1: i32) -> (i32, i32, i32) {
    %c0_i32 = arith.constant 0 : i32
    %c0_i32_0 = arith.constant 0 : i32
    %c0_i32_1 = arith.constant 0 : i32
    return %arg0, %c0_i32, %c0_i32_0 : i32, i32, i32
  }
  func.func @transform_1(%arg0: i32, %arg1: i32) -> (i32, i32) {
    %c0_i32 = arith.constant 0 : i32
    %c0_i32_0 = arith.constant 0 : i32
    %c0_i32_1 = arith.constant 0 : i32
    return %c0_i32, %c0_i32_0 : i32, i32
  }
  func.func @transform_2(%arg0: i32, %arg1: i32) -> (i32, i32) {
    %c0_i32 = arith.constant 0 : i32
    %c0_i32_0 = arith.constant 0 : i32
    %c0_i32_1 = arith.constant 0 : i32
    return %c0_i32, %c0_i32_0 : i32, i32
  }
  func.func @transform_3(%arg0: i32, %arg1: i32) -> (i32, i32) {
    %c0_i32 = arith.constant 0 : i32
    %c0_i32_0 = arith.constant 0 : i32
    %c0_i32_1 = arith.constant 0 : i32
    return %c0_i32, %c0_i32_0 : i32, i32
  }
  func.func @transform_4(%arg0: i32, %arg1: i32) -> (i32, i32, i32) {
    %c0_i32 = arith.constant 0 : i32
    %c0_i32_0 = arith.constant 0 : i32
    return %arg0, %arg1, %c0_i32 : i32, i32, i32
  }
}

</mosaic_0001>

<llo_original>
// kernel: upsample_1.1
$region0: #{upsample_1.1}
  #allocation0 [shape = 'u32[]', space=smem, size = 0x4, offset = 0x4, fixed_abs, tag = 'smem constant byte address 0x4 - core index']
  #allocation1 [shape = 'u32[72,128]{1,0:T(1,128)}', space=vmem, size = 0x9000, scoped, tag = 'internal scratch']
  #allocation2 [shape = 'bf16[82,32]{1,0:T(8,128)(2,1)}', space=vmem, size = 0x5800, scoped, tag = 'scratch operand']
  #allocation3 [shape = 'bf16[64,288]{1,0:T(8,128)(2,1)}', space=vmem, size = 0xc000, scoped, tag = 'scratch operand']
  %s0 = inlined_call_operand.vmem [shape: f32[2,64,32], index: 0, kind: input, shape index: {}]
  %s1 = inlined_call_operand.vmem [shape: bf16[288,128], index: 1, kind: input, shape index: {}]
  %s2 = inlined_call_operand.vmem [shape: bf16[64,32], index: 2, kind: input, shape index: {}]
  %s3 = inlined_call_operand.vmem [shape: bf16[64,32], index: 3, kind: input, shape index: {}]
  %s4 = inlined_call_operand.vmem [shape: f32[2,64,128], index: 4, kind: output, shape index: {}]
  %s5 = sld [smem:[#allocation0]]
  $region65: #{upsample_1.1} parent=0
    _
  %s7 = ssub.s32 1, %s5
  %s8 = scalar_select 0, %s7, %s5
  loop: start=0, step=1, limit=4
  $region2: #{upsample_1.1} parent=0 // loop_pre_header
    _
  $region3: #{upsample_1.1} parent=0 // loop_header
    %s10 = sphi 0, %s14
    %p11 = scmp.ge.s32.totalorder %s10, 4
    %s17 = sphi 0, %s29
    %s18 = sphi 0, %s25
    %s19 = sphi 0, %s17
    %s20 = sphi 0, %s18
    %s21 = sphi 0, %s19
    %s22 = sphi 0, %s20
    %s32 = sphi 0, %s34
    %s35 = sphi 0, %s32
    %s36 = sphi 0, %s35
    %s52 = sphi 0, %s36
    %s56 = sphi 0, %s56
    %s58 = sphi 0, %s56
    %s59 = sphi 0, %s58
    %s73 = sphi 0, %s59
    %s77 = sphi 0, %s77
    %s79 = sphi 0, %s77
    %s80 = sphi 0, %s79
    %s94 = sphi 0, %s80
    %s98 = sphi 0, %s98
    %s100 = sphi 0, %s98
    %s101 = sphi 0, %s100
    %s115 = sphi 0, %s101
    %s123 = sphi 0, %s125
    %s126 = sphi 0, %s123
    %s127 = sphi 0, %s126
    %s143 = sphi 0, %s127
  $region4: #{upsample_1.1} parent=0 // loop_header_branch
    %13 = sbr.rel (%p11) target = $region8
  $region5: #{upsample_1.1} parent=0 // loop_body
    %s15 = ssub.s32 %s10, 1
    %s16 = ssub.s32 %s10, 2
    %s23 = sadd.s32 1, %s18
    %p24 = scmp.ge.s32.totalorder %s23, 1
    %s25 = scalar_select %p24, 0, %s23
    %s26 = sadd.s32 1, %s17
    %s27 = scalar_select %p24, %s26, %s17
    %p28 = scmp.ge.s32.totalorder %s27, 2
    %s29 = scalar_select %p28, 0, %s27
    %s30 = ssub.s32 %s17, %s29
    %p31 = scmp.eq.s32.totalorder %s30, 0
    %s33 = sadd.s32 %s32, 1
    %s34 = scalar_select %p31, %s32, %s33
    %p37 = pneg %p31
    %p38 = scmp.eq.s32.totalorder %s10, 1
    %p39 = por %p37, %p38
    %p40 = scmp.ne.s32.totalorder %s32, %s35
    %p41 = scmp.eq.s32.totalorder %s10, 0
    %p42 = por %p40, %p41
    %p43 = scmp.ne.s32.totalorder %s32, %s35
    %p44 = scmp.eq.s32.totalorder %s15, 1
    %p45 = por %p43, %p44
    %p46 = scmp.ne.s32.totalorder %s35, %s36
    %p47 = scmp.eq.s32.totalorder %s15, 0
    %p48 = por %p46, %p47
    %p49 = scmp.ne.s32.totalorder %s35, %s36
    %p50 = scmp.eq.s32.totalorder %s16, 1
    %p51 = por %p49, %p50
    %p53 = scmp.ne.s32.totalorder %s36, %s52
    %p54 = scmp.eq.s32.totalorder %s16, 0
    %p55 = por %p53, %p54
    %s57 = sadd.s32 %s56, 1
    %p60 = scmp.eq.s32.totalorder %s10, 1
    %p61 = scmp.ne.s32.totalorder %s56, %s58
    %p62 = scmp.eq.s32.totalorder %s10, 0
    %p63 = por %p61, %p62
    %p64 = scmp.ne.s32.totalorder %s56, %s58
    %p65 = scmp.eq.s32.totalorder %s15, 1
    %p66 = por %p64, %p65
    %p67 = scmp.ne.s32.totalorder %s58, %s59
    %p68 = scmp.eq.s32.totalorder %s15, 0
    %p69 = por %p67, %p68
    %p70 = scmp.ne.s32.totalorder %s58, %s59
    %p71 = scmp.eq.s32.totalorder %s16, 1
    %p72 = por %p70, %p71
    %p74 = scmp.ne.s32.totalorder %s59, %s73
    %p75 = scmp.eq.s32.totalorder %s16, 0
    %p76 = por %p74, %p75
    %s78 = sadd.s32 %s77, 1
    %p81 = scmp.eq.s32.totalorder %s10, 1
    %p82 = scmp.ne.s32.totalorder %s77, %s79
    %p83 = scmp.eq.s32.totalorder %s10, 0
    %p84 = por %p82, %p83
    %p85 = scmp.ne.s32.totalorder %s77, %s79
    %p86 = scmp.eq.s32.totalorder %s15, 1
    %p87 = por %p85, %p86
    %p88 = scmp.ne.s32.totalorder %s79, %s80
    %p89 = scmp.eq.s32.totalorder %s15, 0
    %p90 = por %p88, %p89
    %p91 = scmp.ne.s32.totalorder %s79, %s80
    %p92 = scmp.eq.s32.totalorder %s16, 1
    %p93 = por %p91, %p92
    %p95 = scmp.ne.s32.totalorder %s80, %s94
    %p96 = scmp.eq.s32.totalorder %s16, 0
    %p97 = por %p95, %p96
    %s99 = sadd.s32 %s98, 1
    %p102 = scmp.eq.s32.totalorder %s10, 1
    %p103 = scmp.ne.s32.totalorder %s98, %s100
    %p104 = scmp.eq.s32.totalorder %s10, 0
    %p105 = por %p103, %p104
    %p106 = scmp.ne.s32.totalorder %s98, %s100
    %p107 = scmp.eq.s32.totalorder %s15, 1
    %p108 = por %p106, %p107
    %p109 = scmp.ne.s32.totalorder %s100, %s101
    %p110 = scmp.eq.s32.totalorder %s15, 0
    %p111 = por %p109, %p110
    %p112 = scmp.ne.s32.totalorder %s100, %s101
    %p113 = scmp.eq.s32.totalorder %s16, 1
    %p114 = por %p112, %p113
    %p116 = scmp.ne.s32.totalorder %s101, %s115
    %p117 = scmp.eq.s32.totalorder %s16, 0
    %p118 = por %p116, %p117
    %s119 = ssub.s32 %s17, %s29
    %s120 = ssub.s32 %s18, %s25
    %s121 = sor.u32 %s119, %s120
    %p122 = scmp.eq.s32.totalorder %s121, 0
    %s124 = sadd.s32 %s123, 1
    %s125 = scalar_select %p122, %s123, %s124
    %p128 = pneg %p122
    %p129 = scmp.eq.s32.totalorder %s10, 1
    %p130 = por %p128, %p129
    %p131 = scmp.ne.s32.totalorder %s123, %s126
    %p132 = scmp.eq.s32.totalorder %s10, 0
    %p133 = por %p131, %p132
    %p134 = scmp.ne.s32.totalorder %s123, %s126
    %p135 = scmp.eq.s32.totalorder %s15, 1
    %p136 = por %p134, %p135
    %p137 = scmp.ne.s32.totalorder %s126, %s127
    %p138 = scmp.eq.s32.totalorder %s15, 0
    %p139 = por %p137, %p138
    %p140 = scmp.ne.s32.totalorder %s126, %s127
    %p141 = scmp.eq.s32.totalorder %s16, 1
    %p142 = por %p140, %p141
    %p144 = scmp.ne.s32.totalorder %s127, %s143
    %p145 = scmp.eq.s32.totalorder %s16, 0
    %p146 = por %p144, %p145
    %p147 = scmp.le.s32.totalorder 1, %s10
    %p148 = scmp.lt.s32.totalorder %s10, 3
    %p149 = pnand %p147, %p148
    %p150 = pneg %p149
    // Predicated region
    $region9: #{upsample_1.1} parent=5 // pred_check
      _
    $region10: #{upsample_1.1} parent=5 // pred_check_branch
      %152 = sbr.rel (%p149) target = $region12
    $region11: #{upsample_1.1} parent=5 // pred_region
      %s153 = ssub.s32 %s10, 1
      // Predicated region
      $region13: #{upsample_1.1} parent=11 // pred_check
        %p154 = pneg %p69
      $region14: #{upsample_1.1} parent=11 // pred_check_branch
        %156 = sbr.rel (%p154) target = $region16
      $region15: #{upsample_1.1} parent=11 // pred_region
        _
      $region16: #{upsample_1.1} parent=11 // pred_fallthru
        _
      // Predicated region
      $region17: #{upsample_1.1} parent=11 // pred_check
        %p157 = pneg %p90
      $region18: #{upsample_1.1} parent=11 // pred_check_branch
        %159 = sbr.rel (%p157) target = $region20
      $region19: #{upsample_1.1} parent=11 // pred_region
        _
      $region20: #{upsample_1.1} parent=11 // pred_fallthru
        _
      // Predicated region
      $region21: #{upsample_1.1} parent=11 // pred_check
        %p160 = pneg %p111
      $region22: #{upsample_1.1} parent=11 // pred_check_branch
        %162 = sbr.rel (%p160) target = $region24
      $region23: #{upsample_1.1} parent=11 // pred_region
        _
      $region24: #{upsample_1.1} parent=11 // pred_fallthru
        _
    $region12: #{upsample_1.1} parent=5 // pred_fallthru
      _
    %p163 = scmp.lt.s32.totalorder %s10, 2
    // Predicated region
    $region25: #{upsample_1.1} parent=5 // pred_check
      %p164 = pneg %p163
    $region26: #{upsample_1.1} parent=5 // pred_check_branch
      %166 = sbr.rel (%p164) target = $region28
    $region27: #{upsample_1.1} parent=5 // pred_region
      // Predicated region
      $region29: #{upsample_1.1} parent=27 // pred_check
        %p167 = pneg %p42
      $region30: #{upsample_1.1} parent=27 // pred_check_branch
        %169 = sbr.rel (%p167) target = $region32
      $region31: #{upsample_1.1} parent=27 // pred_region
        %p170 = scmp.lt.s32.totalorder %s17, 1
        %s171 = scalar_select %p170, %s17, 1
        %s172 = smul.addr %s171, 8
        %s173 = smul.addr %s172, 8
        %s174 = scalar_lea.vmem %s0, %s173
      $region32: #{upsample_1.1} parent=27 // pred_fallthru
        _
    $region28: #{upsample_1.1} parent=5 // pred_fallthru
      _
    %p175 = scmp.le.s32.totalorder 1, %s10
    %p176 = scmp.lt.s32.totalorder %s10, 3
    %p177 = pnand %p175, %p176
    %p178 = pneg %p177
    // Predicated region
    $region33: #{upsample_1.1} parent=5 // pred_check
      _
    $region34: #{upsample_1.1} parent=5 // pred_check_branch
      %180 = sbr.rel (%p177) target = $region36
    $region35: #{upsample_1.1} parent=5 // pred_region
      %s181 = ssub.s32 %s10, 1
      %p182 = scmp.lt.s32.totalorder %s19, 1
      %s183 = scalar_select %p182, %s19, 1
      %s184 = smul.addr %s183, 8
      %s185 = smul.addr %s184, 8
      %s186 = scalar_lea.vmem %s0, %s185
      %p187 = pneg %p48
      %p188 = pneg %p45
      %p189 = pneg %p69
      %p190 = pneg %p66
      %p191 = pneg %p90
      %p192 = pneg %p87
      %p193 = pneg %p111
      %p194 = pneg %p108
      %p195 = pneg %p139
      %p196 = pneg %p136
      %s197 = smul.u32 8, %s20
      %p198 = scmp.lt.s32.totalorder %s19, 1
      %s199 = scalar_select %p198, %s19, 1
      %p200 = scmp.lt.s32.totalorder %s197, 7
      %s201 = scalar_select %p200, %s197, 7
      %s202 = smul.addr %s199, 8
      %s203 = sadd.s32 %s201, %s202
      %s204 = smul.addr %s203, 8
      %s205 = scalar_lea.vmem %s4, %s204
      %p206 = scmp.lt.s32.totalorder %s19, 1
      %s207 = scalar_select %p206, %s19, 1
      %s208 = smul.addr %s207, 8
      %s209 = smul.addr %s208, 8
      %s210 = scalar_lea.vmem %s0, %s209
      %s211 = smul.u32 8, %s20
      %p212 = scmp.lt.s32.totalorder %s19, 1
      %s213 = scalar_select %p212, %s19, 1
      %p214 = scmp.lt.s32.totalorder %s211, 7
      %s215 = scalar_select %p214, %s211, 7
      %s216 = smul.addr %s213, 8
      %s217 = sadd.s32 %s215, %s216
      %s218 = smul.addr %s217, 8
      %s219 = scalar_lea.vmem %s4, %s218
      %s220 = smul.u32 8, %s20
      %s222 = smul.u32 %s20, 64
      %vm223 = vcmask 253952
      %vm224 = vsmask.f32 256
      %vm225 = vmand %vm223, %vm224
      %v226 = vld [vmem:[#allocation2] sm:$0x1]
      %v227 = vsel %vm225, 0, %v226
      %228 = vst [vmem:[#allocation2] sm:$0x1] %v227
      %vm229 = vsmask.f32 7938
      %vm230 = vmand %vm223, %vm229
      %v231 = vld [vmem:[#allocation2 + $0x28] sm:$0x1]
      %v232 = vsel %vm230, 0, %v231
      %233 = vst [vmem:[#allocation2 + $0x28] sm:$0x1] %v232
      %s234 = scalar_lea.vmem %s210, %s222
      %v235 = vld [vmem:[%s234] sm:$0xff]
      %v236 = vld [vmem:[%s234 + $0x8] sm:$0xff]
      %v237 = vld [vmem:[%s234 + $0x10] sm:$0xff]
      %v238 = vld [vmem:[%s234 + $0x18] sm:$0xff]
      %v239 = vld [vmem:[%s234 + $0x20] sm:$0xff]
      %v240 = vld [vmem:[%s234 + $0x28] sm:$0xff]
      %v241 = vld [vmem:[%s234 + $0x30] sm:$0xff]
      %v242 = vld [vmem:[%s234 + $0x38] sm:$0xff]
      %v243 = vpack.c.bf16 %v235, %v235
      %v244 = vpack.c.bf16 %v236, %v236
      %v245 = vpack.c.bf16 %v237, %v237
      %v246 = vpack.c.bf16 %v238, %v238
      %v247 = vpack.c.bf16 %v239, %v239
      %v248 = vpack.c.bf16 %v240, %v240
      %v249 = vpack.c.bf16 %v241, %v241
      %v250 = vpack.c.bf16 %v242, %v242
      %vm251 = vsmask.f32 4368
      %vm252 = vmor %vm224, %vm251
      %v254 = vshrl.u32 %v243, 16
      %v256 = vrot.slane %v254, 7
      %v257 = vshll.u32 %v243, 16
      %v259 = vor.u32 %v256, %v257
      %v260 = vrot.slane %v256, 4
      %v262 = vshrl.u32 %v244, 16
      %v264 = vrot.slane %v262, 7
      %v265 = vshll.u32 %v244, 16
      %v267 = vor.u32 %v264, %v265
      %v268 = vsel %vm252, %v260, %v267
      %v269 = vrot.slane %v264, 4
      %v271 = vshrl.u32 %v245, 16
      %v273 = vrot.slane %v271, 7
      %v274 = vshll.u32 %v245, 16
      %v276 = vor.u32 %v273, %v274
      %v277 = vsel %vm252, %v269, %v276
      %v278 = vrot.slane %v273, 4
      %v280 = vshrl.u32 %v246, 16
      %v282 = vrot.slane %v280, 7
      %v283 = vshll.u32 %v246, 16
      %v285 = vor.u32 %v282, %v283
      %v286 = vsel %vm252, %v278, %v285
      %v287 = vrot.slane %v282, 4
      %v289 = vshrl.u32 %v247, 16
      %v291 = vrot.slane %v289, 7
      %v292 = vshll.u32 %v247, 16
      %v294 = vor.u32 %v291, %v292
      %v295 = vsel %vm252, %v287, %v294
      %v296 = vrot.slane %v291, 4
      %v298 = vshrl.u32 %v248, 16
      %v300 = vrot.slane %v298, 7
      %v301 = vshll.u32 %v248, 16
      %v303 = vor.u32 %v300, %v301
      %v304 = vsel %vm252, %v296, %v303
      %v305 = vrot.slane %v300, 4
      %v307 = vshrl.u32 %v249, 16
      %v309 = vrot.slane %v307, 7
      %v310 = vshll.u32 %v249, 16
      %v312 = vor.u32 %v309, %v310
      %v313 = vsel %vm252, %v305, %v312
      %v314 = vrot.slane %v309, 4
      %v316 = vshrl.u32 %v250, 16
      %v318 = vrot.slane %v316, 7
      %v319 = vshll.u32 %v250, 16
      %v321 = vor.u32 %v318, %v319
      %v322 = vsel %vm252, %v314, %v321
      %v323 = vrot.slane %v318, 4
      %vm333 = vcmask 257024
      %vm334 = vmand %vm333, %vm229
      %v335 = vld [vmem:[#allocation2 + $0x4] sm:$0xf]
      %v336 = vsel %vm334, %v259, %v335
      %337 = vst [vmem:[#allocation2 + $0x4] sm:$0xf] %v336
      %vm338 = vcmask 257024
      %339 = vst.msk [vmem:[#allocation2 + $0x8] sm:$0xf] %vm338, %v268
      %340 = vst.msk [vmem:[#allocation2 + $0xc] sm:$0xf] %vm338, %v277
      %341 = vst.msk [vmem:[#allocation2 + $0x10] sm:$0xf] %vm338, %v286
      %342 = vst.msk [vmem:[#allocation2 + $0x14] sm:$0xf] %vm338, %v295
      %343 = vst.msk [vmem:[#allocation2 + $0x18] sm:$0xf] %vm338, %v304
      %344 = vst.msk [vmem:[#allocation2 + $0x1c] sm:$0xf] %vm338, %v313
      %345 = vst.msk [vmem:[#allocation2 + $0x20] sm:$0xf] %vm338, %v322
      %v346 = vld [vmem:[#allocation2 + $0x24] sm:$0x1]
      %v347 = vsel %vm225, %v323, %v346
      %348 = vst [vmem:[#allocation2 + $0x24] sm:$0x1] %v347
      %p349 = scmp.eq.s32.totalorder %s20, 0
      // Predicated region
      $region37: #{upsample_1.1} parent=35 // pred_check
        %p350 = pneg %p349
      $region38: #{upsample_1.1} parent=35 // pred_check_branch
        %352 = sbr.rel (%p350) target = $region40
      $region39: #{upsample_1.1} parent=35 // pred_region
        %v353 = vld [vmem:[#allocation2] sm:$0xf]
        %v354 = vsel %vm334, 0, %v353
        %355 = vst [vmem:[#allocation2] sm:$0xf] %v354
        %v356 = vld [vmem:[#allocation2 + $0x4] sm:$0x1]
        %v357 = vsel %vm225, 0, %v356
        %358 = vst [vmem:[#allocation2 + $0x4] sm:$0x1] %v357
      $region40: #{upsample_1.1} parent=35 // pred_fallthru
        _
      %p359 = scmp.gt.s32.totalorder %s20, 0
      // Predicated region
      $region41: #{upsample_1.1} parent=35 // pred_check
        %p360 = pneg %p359
      $region42: #{upsample_1.1} parent=35 // pred_check_branch
        %362 = sbr.rel (%p360) target = $region44
      $region43: #{upsample_1.1} parent=35 // pred_region
        %s363 = ssub.s32 %s222, 8
        %s364 = scalar_lea.vmem %s210, %s363
        %v365 = vld [vmem:[%s364] sm:$0xff]
        %v366 = vpack.c.bf16 %v365, %v365
        %v368 = vshrl.u32 %v366, 16
        %v370 = vrot.slane %v368, 7
        %v371 = vshll.u32 %v366, 16
        %v373 = vor.u32 %v370, %v371
        %v374 = vrot.slane %v370, 4
        %v377 = vld [vmem:[#allocation2] sm:$0xf]
        %v378 = vsel %vm334, %v373, %v377
        %379 = vst [vmem:[#allocation2] sm:$0xf] %v378
        %v380 = vld [vmem:[#allocation2 + $0x4] sm:$0x1]
        %v381 = vsel %vm225, %v374, %v380
        %382 = vst [vmem:[#allocation2 + $0x4] sm:$0x1] %v381
      $region44: #{upsample_1.1} parent=35 // pred_fallthru
        _
      // Predicated region
      $region45: #{upsample_1.1} parent=35 // pred_check
        %p383 = pneg %p349
      $region46: #{upsample_1.1} parent=35 // pred_check_branch
        %385 = sbr.rel (%p383) target = $region48
      $region47: #{upsample_1.1} parent=35 // pred_region
        %v386 = vld [vmem:[#allocation2 + $0x24] sm:$0xf]
        %v387 = vsel %vm334, 0, %v386
        %388 = vst [vmem:[#allocation2 + $0x24] sm:$0xf] %v387
        %v389 = vld [vmem:[#allocation2 + $0x28] sm:$0x1]
        %v390 = vsel %vm225, 0, %v389
        %391 = vst [vmem:[#allocation2 + $0x28] sm:$0x1] %v390
      $region48: #{upsample_1.1} parent=35 // pred_fallthru
        _
      %p392 = scmp.lt.s32.totalorder %s20, 0
      // Predicated region
      $region49: #{upsample_1.1} parent=35 // pred_check
        %p393 = pneg %p392
      $region50: #{upsample_1.1} parent=35 // pred_check_branch
        %395 = sbr.rel (%p393) target = $region52
      $region51: #{upsample_1.1} parent=35 // pred_region
        %s396 = sadd.s32 %s222, 64
        %s397 = scalar_lea.vmem %s210, %s396
        %v398 = vld [vmem:[%s397] sm:$0xff]
        %v399 = vpack.c.bf16 %v398, %v398
        %v401 = vshrl.u32 %v399, 16
        %v403 = vrot.slane %v401, 7
        %v404 = vshll.u32 %v399, 16
        %v406 = vor.u32 %v403, %v404
        %v407 = vrot.slane %v403, 4
        %v410 = vld [vmem:[#allocation2 + $0x24] sm:$0xf]
        %v411 = vsel %vm334, %v406, %v410
        %412 = vst [vmem:[#allocation2 + $0x24] sm:$0xf] %v411
        %v413 = vld [vmem:[#allocation2 + $0x28] sm:$0x1]
        %v414 = vsel %vm225, %v407, %v413
        %415 = vst [vmem:[#allocation2 + $0x28] sm:$0x1] %v414
      $region52: #{upsample_1.1} parent=35 // pred_fallthru
        _
      %v416 = vld [vmem:[#allocation2] sm:$0xf]
      %v417 = vld [vmem:[#allocation2 + $0x4] sm:$0xf]
      %v418 = vld [vmem:[#allocation2 + $0x8] sm:$0xf]
      %v419 = vld [vmem:[#allocation2 + $0xc] sm:$0xf]
      %v420 = vld [vmem:[#allocation2 + $0x10] sm:$0xf]
      %v421 = vld [vmem:[#allocation2 + $0x14] sm:$0xf]
      %v422 = vld [vmem:[#allocation2 + $0x18] sm:$0xf]
      %v423 = vld [vmem:[#allocation2 + $0x1c] sm:$0xf]
      %v424 = vld [vmem:[%s2] sm:$0xf]
      %v425 = vld [vmem:[%s2 + $0x4] sm:$0xf]
      %v426 = vld [vmem:[%s2 + $0x8] sm:$0xf]
      %v427 = vld [vmem:[%s2 + $0xc] sm:$0xf]
      %v428 = vld [vmem:[%s2 + $0x10] sm:$0xf]
      %v429 = vld [vmem:[%s2 + $0x14] sm:$0xf]
      %v430 = vld [vmem:[%s2 + $0x18] sm:$0xf]
      %v431 = vld [vmem:[%s2 + $0x1c] sm:$0xf]
      %v432 = vunpack.c.l.bf16 %v416
      %v433 = vunpack.c.l.bf16 %v417
      %v434 = vunpack.c.l.bf16 %v418
      %v435 = vunpack.c.l.bf16 %v419
      %v436 = vunpack.c.l.bf16 %v420
      %v437 = vunpack.c.l.bf16 %v421
      %v438 = vunpack.c.l.bf16 %v422
      %v439 = vunpack.c.l.bf16 %v423
      %v440 = vunpack.c.l.bf16 %v424
      %v441 = vunpack.c.l.bf16 %v425
      %v442 = vunpack.c.l.bf16 %v426
      %v443 = vunpack.c.l.bf16 %v427
      %v444 = vunpack.c.l.bf16 %v428
      %v445 = vunpack.c.l.bf16 %v429
      %v446 = vunpack.c.l.bf16 %v430
      %v447 = vunpack.c.l.bf16 %v431
      %v448 = vmul.f32 %v432, %v440
      %v449 = vmul.f32 %v433, %v441
      %v450 = vmul.f32 %v434, %v442
      %v451 = vmul.f32 %v435, %v443
      %v452 = vmul.f32 %v436, %v444
      %v453 = vmul.f32 %v437, %v445
      %v454 = vmul.f32 %v438, %v446
      %v455 = vmul.f32 %v439, %v447
      %v456 = vpack.c.bf16 %v448, %v448
      %v457 = vpack.c.bf16 %v449, %v449
      %v458 = vpack.c.bf16 %v450, %v450
      %v459 = vpack.c.bf16 %v451, %v451
      %v460 = vpack.c.bf16 %v452, %v452
      %v461 = vpack.c.bf16 %v453, %v453
      %v462 = vpack.c.bf16 %v454, %v454
      %v463 = vpack.c.bf16 %v455, %v455
      %464 = vst.msk [vmem:[#allocation3] sm:$0xf] %vm338, %v456
      %465 = vst.msk [vmem:[#allocation3 + $0xc] sm:$0xf] %vm338, %v457
      %466 = vst.msk [vmem:[#allocation3 + $0x18] sm:$0xf] %vm338, %v458
      %467 = vst.msk [vmem:[#allocation3 + $0x24] sm:$0xf] %vm338, %v459
      %468 = vst.msk [vmem:[#allocation3 + $0x30] sm:$0xf] %vm338, %v460
      %469 = vst.msk [vmem:[#allocation3 + $0x3c] sm:$0xf] %vm338, %v461
      %470 = vst.msk [vmem:[#allocation3 + $0x48] sm:$0xf] %vm338, %v462
      %471 = vst.msk [vmem:[#allocation3 + $0x54] sm:$0xf] %vm338, %v463
      %v472 = vld [vmem:[#allocation2] sm:$0xf]
      %v473 = vld [vmem:[#allocation2 + $0x4] sm:$0xf]
      %v474 = vld [vmem:[#allocation2 + $0x8] sm:$0xf]
      %v475 = vld [vmem:[#allocation2 + $0xc] sm:$0xf]
      %v476 = vld [vmem:[#allocation2 + $0x10] sm:$0xf]
      %v477 = vld [vmem:[#allocation2 + $0x14] sm:$0xf]
      %v478 = vld [vmem:[#allocation2 + $0x18] sm:$0xf]
      %v479 = vld [vmem:[#allocation2 + $0x1c] sm:$0xf]
      %v480 = vld [vmem:[#allocation2 + $0x20] sm:$0x1]
      %vm481 = vsmask.f32 3328
      %vm482 = vsmask.f32 7440
      %vm483 = vmor %vm481, %vm482
      %v485 = vshrl.u32 %v472, 16
      %v487 = vrot.slane %v485, 4
      %v488 = vshll.u32 %v472, 16
      %v490 = vrot.slane %v488, 5
      %v491 = vor.u32 %v487, %v490
      %v492 = vrot.slane %v491, 4
      %v494 = vshll.u32 %v473, 16
      %v496 = vrot.slane %v494, 5
      %v497 = vsel %vm483, %v492, %v496
      %v498 = vshrl.u32 %v473, 16
      %v500 = vrot.slane %v498, 4
      %v501 = vor.u32 %v500, %v496
      %v502 = vrot.slane %v501, 4
      %v504 = vshll.u32 %v474, 16
      %v506 = vrot.slane %v504, 5
      %v507 = vsel %vm483, %v502, %v506
      %v508 = vshrl.u32 %v474, 16
      %v510 = vrot.slane %v508, 4
      %v511 = vor.u32 %v510, %v506
      %v512 = vrot.slane %v511, 4
      %v514 = vshll.u32 %v475, 16
      %v516 = vrot.slane %v514, 5
      %v517 = vsel %vm483, %v512, %v516
      %v518 = vshrl.u32 %v475, 16
      %v520 = vrot.slane %v518, 4
      %v521 = vor.u32 %v520, %v516
      %v522 = vrot.slane %v521, 4
      %v524 = vshll.u32 %v476, 16
      %v526 = vrot.slane %v524, 5
      %v527 = vsel %vm483, %v522, %v526
      %v528 = vshrl.u32 %v476, 16
      %v530 = vrot.slane %v528, 4
      %v531 = vor.u32 %v530, %v526
      %v532 = vrot.slane %v531, 4
      %v534 = vshll.u32 %v477, 16
      %v536 = vrot.slane %v534, 5
      %v537 = vsel %vm483, %v532, %v536
      %v538 = vshrl.u32 %v477, 16
      %v540 = vrot.slane %v538, 4
      %v541 = vor.u32 %v540, %v536
      %v542 = vrot.slane %v541, 4
      %v544 = vshll.u32 %v478, 16
      %v546 = vrot.slane %v544, 5
      %v547 = vsel %vm483, %v542, %v546
      %v548 = vshrl.u32 %v478, 16
      %v550 = vrot.slane %v548, 4
      %v551 = vor.u32 %v550, %v546
      %v552 = vrot.slane %v551, 4
      %v554 = vshll.u32 %v479, 16
      %v556 = vrot.slane %v554, 5
      %v557 = vsel %vm483, %v552, %v556
      %v558 = vshrl.u32 %v479, 16
      %v560 = vrot.slane %v558, 4
      %v561 = vor.u32 %v560, %v556
      %v562 = vrot.slane %v561, 4
      %v564 = vshll.u32 %v480, 16
      %v566 = vrot.slane %v564, 5
      %v567 = vsel %vm483, %v562, %v566
      %568 = vrot.lane.b32.xlu0 %v497, 32
      %v569 = vpop.permute.xlu0 %568
      %570 = vrot.lane.b32.xlu0 %v507, 32
      %v571 = vpop.permute.xlu0 %570
      %572 = vrot.lane.b32.xlu0 %v517, 32
      %v573 = vpop.permute.xlu0 %572
      %574 = vrot.lane.b32.xlu0 %v527, 32
      %v575 = vpop.permute.xlu0 %574
      %576 = vrot.lane.b32.xlu0 %v537, 32
      %v577 = vpop.permute.xlu0 %576
      %578 = vrot.lane.b32.xlu0 %v547, 32
      %v579 = vpop.permute.xlu0 %578
      %580 = vrot.lane.b32.xlu0 %v557, 32
      %v581 = vpop.permute.xlu0 %580
      %582 = vrot.lane.b32.xlu0 %v567, 32
      %v583 = vpop.permute.xlu0 %582
      %vm592 = vcmask 519424
      %593 = vst.msk [vmem:[#allocation3] sm:$0xf] %vm592, %v569
      %594 = vst.msk [vmem:[#allocation3 + $0xc] sm:$0xf] %vm592, %v571
      %595 = vst.msk [vmem:[#allocation3 + $0x18] sm:$0xf] %vm592, %v573
      %596 = vst.msk [vmem:[#allocation3 + $0x24] sm:$0xf] %vm592, %v575
      %597 = vst.msk [vmem:[#allocation3 + $0x30] sm:$0xf] %vm592, %v577
      %598 = vst.msk [vmem:[#allocation3 + $0x3c] sm:$0xf] %vm592, %v579
      %599 = vst.msk [vmem:[#allocation3 + $0x48] sm:$0xf] %vm592, %v581
      %600 = vst.msk [vmem:[#allocation3 + $0x54] sm:$0xf] %vm592, %v583
      %v601 = vld [vmem:[#allocation2] sm:$0xe]
      %v602 = vld [vmem:[#allocation2 + $0x4] sm:$0xf]
      %v603 = vld [vmem:[#allocation2 + $0x8] sm:$0xf]
      %v604 = vld [vmem:[#allocation2 + $0xc] sm:$0xf]
      %v605 = vld [vmem:[#allocation2 + $0x10] sm:$0xf]
      %v606 = vld [vmem:[#allocation2 + $0x14] sm:$0xf]
      %v607 = vld [vmem:[#allocation2 + $0x18] sm:$0xf]
      %v608 = vld [vmem:[#allocation2 + $0x1c] sm:$0xf]
      %v609 = vld [vmem:[#allocation2 + $0x20] sm:$0x1]
      %v610 = vld [vmem:[%s3] sm:$0xf]
      %v611 = vld [vmem:[%s3 + $0x4] sm:$0xf]
      %v612 = vld [vmem:[%s3 + $0x8] sm:$0xf]
      %v613 = vld [vmem:[%s3 + $0xc] sm:$0xf]
      %v614 = vld [vmem:[%s3 + $0x10] sm:$0xf]
      %v615 = vld [vmem:[%s3 + $0x14] sm:$0xf]
      %v616 = vld [vmem:[%s3 + $0x18] sm:$0xf]
      %v617 = vld [vmem:[%s3 + $0x1c] sm:$0xf]
      %v618 = vunpack.c.l.bf16 %v601
      %v619 = vunpack.c.l.bf16 %v602
      %v620 = vunpack.c.l.bf16 %v603
      %v621 = vunpack.c.l.bf16 %v604
      %v622 = vunpack.c.l.bf16 %v605
      %v623 = vunpack.c.l.bf16 %v606
      %v624 = vunpack.c.l.bf16 %v607
      %v625 = vunpack.c.l.bf16 %v608
      %v626 = vunpack.c.l.bf16 %v609
      %v627 = vunpack.c.l.bf16 %v610
      %v628 = vunpack.c.l.bf16 %v611
      %v629 = vunpack.c.l.bf16 %v612
      %v630 = vunpack.c.l.bf16 %v613
      %v631 = vunpack.c.l.bf16 %v614
      %v632 = vunpack.c.l.bf16 %v615
      %v633 = vunpack.c.l.bf16 %v616
      %v634 = vunpack.c.l.bf16 %v617
      %vm643 = vcmask 1041408
      %v644 = vrot.slane %v627, 6
      %v645 = vrot.slane %v628, 6
      %v646 = vsel %vm643, %v644, %v645
      %v647 = vrot.slane %v629, 6
      %v648 = vsel %vm643, %v645, %v647
      %v649 = vrot.slane %v630, 6
      %v650 = vsel %vm643, %v647, %v649
      %v651 = vrot.slane %v631, 6
      %v652 = vsel %vm643, %v649, %v651
      %v653 = vrot.slane %v632, 6
      %v654 = vsel %vm643, %v651, %v653
      %v655 = vrot.slane %v633, 6
      %v656 = vsel %vm643, %v653, %v655
      %v657 = vrot.slane %v634, 6
      %v658 = vsel %vm643, %v655, %v657
      %v668 = vmul.f32 %v618, %v644
      %v669 = vmul.f32 %v619, %v646
      %v670 = vmul.f32 %v620, %v648
      %v671 = vmul.f32 %v621, %v650
      %v672 = vmul.f32 %v622, %v652
      %v673 = vmul.f32 %v623, %v654
      %v674 = vmul.f32 %v624, %v656
      %v675 = vmul.f32 %v625, %v658
      %v676 = vmul.f32 %v626, %v657
      %v677 = vpack.c.bf16 %v668, %v668
      %v678 = vpack.c.bf16 %v669, %v669
      %v679 = vpack.c.bf16 %v670, %v670
      %v680 = vpack.c.bf16 %v671, %v671
      %v681 = vpack.c.bf16 %v672, %v672
      %v682 = vpack.c.bf16 %v673, %v673
      %v683 = vpack.c.bf16 %v674, %v674
      %v684 = vpack.c.bf16 %v675, %v675
      %v685 = vpack.c.bf16 %v676, %v676
      %vm695 = vcmask 1042432
      %vm696 = vcmask 1046532
      %vm697 = vmor %vm695, %vm696
      %v698 = vrot.slane %v677, 5
      %v699 = vrot.slane %v698, 4
      %v700 = vrot.slane %v678, 5
      %v701 = vsel %vm697, %v699, %v700
      %v702 = vrot.slane %v700, 4
      %v703 = vrot.slane %v679, 5
      %v704 = vsel %vm697, %v702, %v703
      %v705 = vrot.slane %v703, 4
      %v706 = vrot.slane %v680, 5
      %v707 = vsel %vm697, %v705, %v706
      %v708 = vrot.slane %v706, 4
      %v709 = vrot.slane %v681, 5
      %v710 = vsel %vm697, %v708, %v709
      %v711 = vrot.slane %v709, 4
      %v712 = vrot.slane %v682, 5
      %v713 = vsel %vm697, %v711, %v712
      %v714 = vrot.slane %v712, 4
      %v715 = vrot.slane %v683, 5
      %v716 = vsel %vm697, %v714, %v715
      %v717 = vrot.slane %v715, 4
      %v718 = vrot.slane %v684, 5
      %v719 = vsel %vm697, %v717, %v718
      %v720 = vrot.slane %v718, 4
      %v721 = vrot.slane %v685, 5
      %v722 = vsel %vm697, %v720, %v721
      %723 = vrot.lane.b32.xlu0 %v701, 64
      %v724 = vpop.permute.xlu0 %723
      %725 = vrot.lane.b32.xlu0 %v704, 64
      %v726 = vpop.permute.xlu0 %725
      %727 = vrot.lane.b32.xlu0 %v707, 64
      %v728 = vpop.permute.xlu0 %727
      %729 = vrot.lane.b32.xlu0 %v710, 64
      %v730 = vpop.permute.xlu0 %729
      %731 = vrot.lane.b32.xlu0 %v713, 64
      %v732 = vpop.permute.xlu0 %731
      %733 = vrot.lane.b32.xlu0 %v716, 64
      %v734 = vpop.permute.xlu0 %733
      %735 = vrot.lane.b32.xlu0 %v719, 64
      %v736 = vpop.permute.xlu0 %735
      %737 = vrot.lane.b32.xlu0 %v722, 64
      %v738 = vpop.permute.xlu0 %737
      %vm747 = vcmask 781824
      %748 = vst.msk [vmem:[#allocation3] sm:$0xf] %vm747, %v724
      %749 = vst.msk [vmem:[#allocation3 + $0xc] sm:$0xf] %vm747, %v726
      %750 = vst.msk [vmem:[#allocation3 + $0x18] sm:$0xf] %vm747, %v728
      %751 = vst.msk [vmem:[#allocation3 + $0x24] sm:$0xf] %vm747, %v730
      %752 = vst.msk [vmem:[#allocation3 + $0x30] sm:$0xf] %vm747, %v732
      %753 = vst.msk [vmem:[#allocation3 + $0x3c] sm:$0xf] %vm747, %v734
      %754 = vst.msk [vmem:[#allocation3 + $0x48] sm:$0xf] %vm747, %v736
      %755 = vst.msk [vmem:[#allocation3 + $0x54] sm:$0xf] %vm747, %v738
      %v756 = vld [vmem:[#allocation2 + $0x4] sm:$0xf]
      %v757 = vld [vmem:[#allocation2 + $0x8] sm:$0xf]
      %v758 = vld [vmem:[#allocation2 + $0xc] sm:$0xf]
      %v759 = vld [vmem:[#allocation2 + $0x10] sm:$0xf]
      %v760 = vld [vmem:[#allocation2 + $0x14] sm:$0xf]
      %v761 = vld [vmem:[#allocation2 + $0x18] sm:$0xf]
      %v762 = vld [vmem:[#allocation2 + $0x1c] sm:$0xf]
      %v763 = vld [vmem:[#allocation2 + $0x20] sm:$0xf]
      %v764 = vld [vmem:[%s2] sm:$0xf]
      %v765 = vld [vmem:[%s2 + $0x4] sm:$0xf]
      %v766 = vld [vmem:[%s2 + $0x8] sm:$0xf]
      %v767 = vld [vmem:[%s2 + $0xc] sm:$0xf]
      %v768 = vld [vmem:[%s2 + $0x10] sm:$0xf]
      %v769 = vld [vmem:[%s2 + $0x14] sm:$0xf]
      %v770 = vld [vmem:[%s2 + $0x18] sm:$0xf]
      %v771 = vld [vmem:[%s2 + $0x1c] sm:$0xf]
      %v772 = vunpack.c.l.bf16 %v756
      %v773 = vunpack.c.l.bf16 %v757
      %v774 = vunpack.c.l.bf16 %v758
      %v775 = vunpack.c.l.bf16 %v759
      %v776 = vunpack.c.l.bf16 %v760
      %v777 = vunpack.c.l.bf16 %v761
      %v778 = vunpack.c.l.bf16 %v762
      %v779 = vunpack.c.l.bf16 %v763
      %v780 = vunpack.c.l.bf16 %v764
      %v781 = vunpack.c.l.bf16 %v765
      %v782 = vunpack.c.l.bf16 %v766
      %v783 = vunpack.c.l.bf16 %v767
      %v784 = vunpack.c.l.bf16 %v768
      %v785 = vunpack.c.l.bf16 %v769
      %v786 = vunpack.c.l.bf16 %v770
      %v787 = vunpack.c.l.bf16 %v771
      %v788 = vmul.f32 %v772, %v780
      %v789 = vmul.f32 %v773, %v781
      %v790 = vmul.f32 %v774, %v782
      %v791 = vmul.f32 %v775, %v783
      %v792 = vmul.f32 %v776, %v784
      %v793 = vmul.f32 %v777, %v785
      %v794 = vmul.f32 %v778, %v786
      %v795 = vmul.f32 %v779, %v787
      %v796 = vpack.c.bf16 %v788, %v788
      %v797 = vpack.c.bf16 %v789, %v789
      %v798 = vpack.c.bf16 %v790, %v790
      %v799 = vpack.c.bf16 %v791, %v791
      %v800 = vpack.c.bf16 %v792, %v792
      %v801 = vpack.c.bf16 %v793, %v793
      %v802 = vpack.c.bf16 %v794, %v794
      %v803 = vpack.c.bf16 %v795, %v795
      %812 = vrot.lane.b32.xlu0 %v796, 96
      %v813 = vpop.permute.xlu0 %812
      %814 = vrot.lane.b32.xlu0 %v797, 96
      %v815 = vpop.permute.xlu0 %814
      %816 = vrot.lane.b32.xlu0 %v798, 96
      %v817 = vpop.permute.xlu0 %816
      %818 = vrot.lane.b32.xlu0 %v799, 96
      %v819 = vpop.permute.xlu0 %818
      %820 = vrot.lane.b32.xlu0 %v800, 96
      %v821 = vpop.permute.xlu0 %820
      %822 = vrot.lane.b32.xlu0 %v801, 96
      %v823 = vpop.permute.xlu0 %822
      %824 = vrot.lane.b32.xlu0 %v802, 96
      %v825 = vpop.permute.xlu0 %824
      %826 = vrot.lane.b32.xlu0 %v803, 96
      %v827 = vpop.permute.xlu0 %826
      %vm836 = vcmask 1044224
      %837 = vst.msk [vmem:[#allocation3] sm:$0xf] %vm836, %v813
      %838 = vst.msk [vmem:[#allocation3 + $0xc] sm:$0xf] %vm836, %v815
      %839 = vst.msk [vmem:[#allocation3 + $0x18] sm:$0xf] %vm836, %v817
      %840 = vst.msk [vmem:[#allocation3 + $0x24] sm:$0xf] %vm836, %v819
      %841 = vst.msk [vmem:[#allocation3 + $0x30] sm:$0xf] %vm836, %v821
      %842 = vst.msk [vmem:[#allocation3 + $0x3c] sm:$0xf] %vm836, %v823
      %843 = vst.msk [vmem:[#allocation3 + $0x48] sm:$0xf] %vm836, %v825
      %844 = vst.msk [vmem:[#allocation3 + $0x54] sm:$0xf] %vm836, %v827
      %v845 = vld [vmem:[#allocation2 + $0x4] sm:$0xf]
      %v846 = vld [vmem:[#allocation2 + $0x8] sm:$0xf]
      %v847 = vld [vmem:[#allocation2 + $0xc] sm:$0xf]
      %v848 = vld [vmem:[#allocation2 + $0x10] sm:$0xf]
      %v849 = vld [vmem:[#allocation2 + $0x14] sm:$0xf]
      %v850 = vld [vmem:[#allocation2 + $0x18] sm:$0xf]
      %v851 = vld [vmem:[#allocation2 + $0x1c] sm:$0xf]
      %v852 = vld [vmem:[#allocation2 + $0x20] sm:$0xf]
      %v853 = vld [vmem:[#allocation2 + $0x24] sm:$0x1]
      %v855 = vshrl.u32 %v845, 16
      %v857 = vrot.slane %v855, 4
      %v858 = vshll.u32 %v845, 16
      %v860 = vrot.slane %v858, 5
      %v861 = vor.u32 %v857, %v860
      %v862 = vrot.slane %v861, 4
      %v864 = vshll.u32 %v846, 16
      %v866 = vrot.slane %v864, 5
      %v867 = vsel %vm483, %v862, %v866
      %v868 = vshrl.u32 %v846, 16
      %v870 = vrot.slane %v868, 4
      %v871 = vor.u32 %v870, %v866
      %v872 = vrot.slane %v871, 4
      %v874 = vshll.u32 %v847, 16
      %v876 = vrot.slane %v874, 5
      %v877 = vsel %vm483, %v872, %v876
      %v878 = vshrl.u32 %v847, 16
      %v880 = vrot.slane %v878, 4
      %v881 = vor.u32 %v880, %v876
      %v882 = vrot.slane %v881, 4
      %v884 = vshll.u32 %v848, 16
      %v886 = vrot.slane %v884, 5
      %v887 = vsel %vm483, %v882, %v886
      %v888 = vshrl.u32 %v848, 16
      %v890 = vrot.slane %v888, 4
      %v891 = vor.u32 %v890, %v886
      %v892 = vrot.slane %v891, 4
      %v894 = vshll.u32 %v849, 16
      %v896 = vrot.slane %v894, 5
      %v897 = vsel %vm483, %v892, %v896
      %v898 = vshrl.u32 %v849, 16
      %v900 = vrot.slane %v898, 4
      %v901 = vor.u32 %v900, %v896
      %v902 = vrot.slane %v901, 4
      %v904 = vshll.u32 %v850, 16
      %v906 = vrot.slane %v904, 5
      %v907 = vsel %vm483, %v902, %v906
      %v908 = vshrl.u32 %v850, 16
      %v910 = vrot.slane %v908, 4
      %v911 = vor.u32 %v910, %v906
      %v912 = vrot.slane %v911, 4
      %v914 = vshll.u32 %v851, 16
      %v916 = vrot.slane %v914, 5
      %v917 = vsel %vm483, %v912, %v916
      %v918 = vshrl.u32 %v851, 16
      %v920 = vrot.slane %v918, 4
      %v921 = vor.u32 %v920, %v916
      %v922 = vrot.slane %v921, 4
      %v924 = vshll.u32 %v852, 16
      %v926 = vrot.slane %v924, 5
      %v927 = vsel %vm483, %v922, %v926
      %v928 = vshrl.u32 %v852, 16
      %v930 = vrot.slane %v928, 4
      %v931 = vor.u32 %v930, %v926
      %v932 = vrot.slane %v931, 4
      %v934 = vshll.u32 %v853, 16
      %v936 = vrot.slane %v934, 5
      %v937 = vsel %vm483, %v932, %v936
      %946 = vst.msk [vmem:[#allocation3 + $0x4] sm:$0xf] %vm338, %v867
      %947 = vst.msk [vmem:[#allocation3 + $0x10] sm:$0xf] %vm338, %v877
      %948 = vst.msk [vmem:[#allocation3 + $0x1c] sm:$0xf] %vm338, %v887
      %949 = vst.msk [vmem:[#allocation3 + $0x28] sm:$0xf] %vm338, %v897
      %950 = vst.msk [vmem:[#allocation3 + $0x34] sm:$0xf] %vm338, %v907
      %951 = vst.msk [vmem:[#allocation3 + $0x40] sm:$0xf] %vm338, %v917
      %952 = vst.msk [vmem:[#allocation3 + $0x4c] sm:$0xf] %vm338, %v927
      %953 = vst.msk [vmem:[#allocation3 + $0x58] sm:$0xf] %vm338, %v937
      %v954 = vld [vmem:[#allocation2 + $0x4] sm:$0xe]
      %v955 = vld [vmem:[#allocation2 + $0x8] sm:$0xf]
      %v956 = vld [vmem:[#allocation2 + $0xc] sm:$0xf]
      %v957 = vld [vmem:[#allocation2 + $0x10] sm:$0xf]
      %v958 = vld [vmem:[#allocation2 + $0x14] sm:$0xf]
      %v959 = vld [vmem:[#allocation2 + $0x18] sm:$0xf]
      %v960 = vld [vmem:[#allocation2 + $0x1c] sm:$0xf]
      %v961 = vld [vmem:[#allocation2 + $0x20] sm:$0xf]
      %v962 = vld [vmem:[#allocation2 + $0x24] sm:$0x1]
      %v963 = vld [vmem:[%s3] sm:$0xf]
      %v964 = vld [vmem:[%s3 + $0x4] sm:$0xf]
      %v965 = vld [vmem:[%s3 + $0x8] sm:$0xf]
      %v966 = vld [vmem:[%s3 + $0xc] sm:$0xf]
      %v967 = vld [vmem:[%s3 + $0x10] sm:$0xf]
      %v968 = vld [vmem:[%s3 + $0x14] sm:$0xf]
      %v969 = vld [vmem:[%s3 + $0x18] sm:$0xf]
      %v970 = vld [vmem:[%s3 + $0x1c] sm:$0xf]
      %v971 = vunpack.c.l.bf16 %v954
      %v972 = vunpack.c.l.bf16 %v955
      %v973 = vunpack.c.l.bf16 %v956
      %v974 = vunpack.c.l.bf16 %v957
      %v975 = vunpack.c.l.bf16 %v958
      %v976 = vunpack.c.l.bf16 %v959
      %v977 = vunpack.c.l.bf16 %v960
      %v978 = vunpack.c.l.bf16 %v961
      %v979 = vunpack.c.l.bf16 %v962
      %v980 = vunpack.c.l.bf16 %v963
      %v981 = vunpack.c.l.bf16 %v964
      %v982 = vunpack.c.l.bf16 %v965
      %v983 = vunpack.c.l.bf16 %v966
      %v984 = vunpack.c.l.bf16 %v967
      %v985 = vunpack.c.l.bf16 %v968
      %v986 = vunpack.c.l.bf16 %v969
      %v987 = vunpack.c.l.bf16 %v970
      %v996 = vrot.slane %v980, 6
      %v997 = vrot.slane %v981, 6
      %v998 = vsel %vm643, %v996, %v997
      %v999 = vrot.slane %v982, 6
      %v1000 = vsel %vm643, %v997, %v999
      %v1001 = vrot.slane %v983, 6
      %v1002 = vsel %vm643, %v999, %v1001
      %v1003 = vrot.slane %v984, 6
      %v1004 = vsel %vm643, %v1001, %v1003
      %v1005 = vrot.slane %v985, 6
      %v1006 = vsel %vm643, %v1003, %v1005
      %v1007 = vrot.slane %v986, 6
      %v1008 = vsel %vm643, %v1005, %v1007
      %v1009 = vrot.slane %v987, 6
      %v1010 = vsel %vm643, %v1007, %v1009
      %v1020 = vmul.f32 %v971, %v996
      %v1021 = vmul.f32 %v972, %v998
      %v1022 = vmul.f32 %v973, %v1000
      %v1023 = vmul.f32 %v974, %v1002
      %v1024 = vmul.f32 %v975, %v1004
      %v1025 = vmul.f32 %v976, %v1006
      %v1026 = vmul.f32 %v977, %v1008
      %v1027 = vmul.f32 %v978, %v1010
      %v1028 = vmul.f32 %v979, %v1009
      %v1029 = vpack.c.bf16 %v1020, %v1020
      %v1030 = vpack.c.bf16 %v1021, %v1021
      %v1031 = vpack.c.bf16 %v1022, %v1022
      %v1032 = vpack.c.bf16 %v1023, %v1023
      %v1033 = vpack.c.bf16 %v1024, %v1024
      %v1034 = vpack.c.bf16 %v1025, %v1025
      %v1035 = vpack.c.bf16 %v1026, %v1026
      %v1036 = vpack.c.bf16 %v1027, %v1027
      %v1037 = vpack.c.bf16 %v1028, %v1028
      %v1047 = vrot.slane %v1029, 5
      %v1048 = vrot.slane %v1047, 4
      %v1049 = vrot.slane %v1030, 5
      %v1050 = vsel %vm697, %v1048, %v1049
      %v1051 = vrot.slane %v1049, 4
      %v1052 = vrot.slane %v1031, 5
      %v1053 = vsel %vm697, %v1051, %v1052
      %v1054 = vrot.slane %v1052, 4
      %v1055 = vrot.slane %v1032, 5
      %v1056 = vsel %vm697, %v1054, %v1055
      %v1057 = vrot.slane %v1055, 4
      %v1058 = vrot.slane %v1033, 5
      %v1059 = vsel %vm697, %v1057, %v1058
      %v1060 = vrot.slane %v1058, 4
      %v1061 = vrot.slane %v1034, 5
      %v1062 = vsel %vm697, %v1060, %v1061
      %v1063 = vrot.slane %v1061, 4
      %v1064 = vrot.slane %v1035, 5
      %v1065 = vsel %vm697, %v1063, %v1064
      %v1066 = vrot.slane %v1064, 4
      %v1067 = vrot.slane %v1036, 5
      %v1068 = vsel %vm697, %v1066, %v1067
      %v1069 = vrot.slane %v1067, 4
      %v1070 = vrot.slane %v1037, 5
      %v1071 = vsel %vm697, %v1069, %v1070
      %1072 = vrot.lane.b32.xlu0 %v1050, 32
      %v1073 = vpop.permute.xlu0 %1072
      %1074 = vrot.lane.b32.xlu0 %v1053, 32
      %v1075 = vpop.permute.xlu0 %1074
      %1076 = vrot.lane.b32.xlu0 %v1056, 32
      %v1077 = vpop.permute.xlu0 %1076
      %1078 = vrot.lane.b32.xlu0 %v1059, 32
      %v1079 = vpop.permute.xlu0 %1078
      %1080 = vrot.lane.b32.xlu0 %v1062, 32
      %v1081 = vpop.permute.xlu0 %1080
      %1082 = vrot.lane.b32.xlu0 %v1065, 32
      %v1083 = vpop.permute.xlu0 %1082
      %1084 = vrot.lane.b32.xlu0 %v1068, 32
      %v1085 = vpop.permute.xlu0 %1084
      %1086 = vrot.lane.b32.xlu0 %v1071, 32
      %v1087 = vpop.permute.xlu0 %1086
      %1096 = vst.msk [vmem:[#allocation3 + $0x4] sm:$0xf] %vm592, %v1073
      %1097 = vst.msk [vmem:[#allocation3 + $0x10] sm:$0xf] %vm592, %v1075
      %1098 = vst.msk [vmem:[#allocation3 + $0x1c] sm:$0xf] %vm592, %v1077
      %1099 = vst.msk [vmem:[#allocation3 + $0x28] sm:$0xf] %vm592, %v1079
      %1100 = vst.msk [vmem:[#allocation3 + $0x34] sm:$0xf] %vm592, %v1081
      %1101 = vst.msk [vmem:[#allocation3 + $0x40] sm:$0xf] %vm592, %v1083
      %1102 = vst.msk [vmem:[#allocation3 + $0x4c] sm:$0xf] %vm592, %v1085
      %1103 = vst.msk [vmem:[#allocation3 + $0x58] sm:$0xf] %vm592, %v1087
      %v1104 = vld [vmem:[#allocation2 + $0x8] sm:$0xf]
      %v1105 = vld [vmem:[#allocation2 + $0xc] sm:$0xf]
      %v1106 = vld [vmem:[#allocation2 + $0x10] sm:$0xf]
      %v1107 = vld [vmem:[#allocation2 + $0x14] sm:$0xf]
      %v1108 = vld [vmem:[#allocation2 + $0x18] sm:$0xf]
      %v1109 = vld [vmem:[#allocation2 + $0x1c] sm:$0xf]
      %v1110 = vld [vmem:[#allocation2 + $0x20] sm:$0xf]
      %v1111 = vld [vmem:[#allocation2 + $0x24] sm:$0xf]
      %v1112 = vld [vmem:[%s2] sm:$0xf]
      %v1113 = vld [vmem:[%s2 + $0x4] sm:$0xf]
      %v1114 = vld [vmem:[%s2 + $0x8] sm:$0xf]
      %v1115 = vld [vmem:[%s2 + $0xc] sm:$0xf]
      %v1116 = vld [vmem:[%s2 + $0x10] sm:$0xf]
      %v1117 = vld [vmem:[%s2 + $0x14] sm:$0xf]
      %v1118 = vld [vmem:[%s2 + $0x18] sm:$0xf]
      %v1119 = vld [vmem:[%s2 + $0x1c] sm:$0xf]
      %v1120 = vunpack.c.l.bf16 %v1104
      %v1121 = vunpack.c.l.bf16 %v1105
      %v1122 = vunpack.c.l.bf16 %v1106
      %v1123 = vunpack.c.l.bf16 %v1107
      %v1124 = vunpack.c.l.bf16 %v1108
      %v1125 = vunpack.c.l.bf16 %v1109
      %v1126 = vunpack.c.l.bf16 %v1110
      %v1127 = vunpack.c.l.bf16 %v1111
      %v1128 = vunpack.c.l.bf16 %v1112
      %v1129 = vunpack.c.l.bf16 %v1113
      %v1130 = vunpack.c.l.bf16 %v1114
      %v1131 = vunpack.c.l.bf16 %v1115
      %v1132 = vunpack.c.l.bf16 %v1116
      %v1133 = vunpack.c.l.bf16 %v1117
      %v1134 = vunpack.c.l.bf16 %v1118
      %v1135 = vunpack.c.l.bf16 %v1119
      %v1136 = vmul.f32 %v1120, %v1128
      %v1137 = vmul.f32 %v1121, %v1129
      %v1138 = vmul.f32 %v1122, %v1130
      %v1139 = vmul.f32 %v1123, %v1131
      %v1140 = vmul.f32 %v1124, %v1132
      %v1141 = vmul.f32 %v1125, %v1133
      %v1142 = vmul.f32 %v1126, %v1134
      %v1143 = vmul.f32 %v1127, %v1135
      %v1144 = vpack.c.bf16 %v1136, %v1136
      %v1145 = vpack.c.bf16 %v1137, %v1137
      %v1146 = vpack.c.bf16 %v1138, %v1138
      %v1147 = vpack.c.bf16 %v1139, %v1139
      %v1148 = vpack.c.bf16 %v1140, %v1140
      %v1149 = vpack.c.bf16 %v1141, %v1141
      %v1150 = vpack.c.bf16 %v1142, %v1142
      %v1151 = vpack.c.bf16 %v1143, %v1143
      %1160 = vrot.lane.b32.xlu0 %v1144, 64
      %v1161 = vpop.permute.xlu0 %1160
      %1162 = vrot.lane.b32.xlu0 %v1145, 64
      %v1163 = vpop.permute.xlu0 %1162
      %1164 = vrot.lane.b32.xlu0 %v1146, 64
      %v1165 = vpop.permute.xlu0 %1164
      %1166 = vrot.lane.b32.xlu0 %v1147, 64
      %v1167 = vpop.permute.xlu0 %1166
      %1168 = vrot.lane.b32.xlu0 %v1148, 64
      %v1169 = vpop.permute.xlu0 %1168
      %1170 = vrot.lane.b32.xlu0 %v1149, 64
      %v1171 = vpop.permute.xlu0 %1170
      %1172 = vrot.lane.b32.xlu0 %v1150, 64
      %v1173 = vpop.permute.xlu0 %1172
      %1174 = vrot.lane.b32.xlu0 %v1151, 64
      %v1175 = vpop.permute.xlu0 %1174
      %1184 = vst.msk [vmem:[#allocation3 + $0x4] sm:$0xf] %vm747, %v1161
      %1185 = vst.msk [vmem:[#allocation3 + $0x10] sm:$0xf] %vm747, %v1163
      %1186 = vst.msk [vmem:[#allocation3 + $0x1c] sm:$0xf] %vm747, %v1165
      %1187 = vst.msk [vmem:[#allocation3 + $0x28] sm:$0xf] %vm747, %v1167
      %1188 = vst.msk [vmem:[#allocation3 + $0x34] sm:$0xf] %vm747, %v1169
      %1189 = vst.msk [vmem:[#allocation3 + $0x40] sm:$0xf] %vm747, %v1171
      %1190 = vst.msk [vmem:[#allocation3 + $0x4c] sm:$0xf] %vm747, %v1173
      %1191 = vst.msk [vmem:[#allocation3 + $0x58] sm:$0xf] %vm747, %v1175
      %v1192 = vld [vmem:[#allocation2 + $0x8] sm:$0xf]
      %v1193 = vld [vmem:[#allocation2 + $0xc] sm:$0xf]
      %v1194 = vld [vmem:[#allocation2 + $0x10] sm:$0xf]
      %v1195 = vld [vmem:[#allocation2 + $0x14] sm:$0xf]
      %v1196 = vld [vmem:[#allocation2 + $0x18] sm:$0xf]
      %v1197 = vld [vmem:[#allocation2 + $0x1c] sm:$0xf]
      %v1198 = vld [vmem:[#allocation2 + $0x20] sm:$0xf]
      %v1199 = vld [vmem:[#allocation2 + $0x24] sm:$0xf]
      %v1200 = vld [vmem:[#allocation2 + $0x28] sm:$0x1]
      %v1202 = vshrl.u32 %v1192, 16
      %v1204 = vrot.slane %v1202, 4
      %v1205 = vshll.u32 %v1192, 16
      %v1207 = vrot.slane %v1205, 5
      %v1208 = vor.u32 %v1204, %v1207
      %v1209 = vrot.slane %v1208, 4
      %v1211 = vshll.u32 %v1193, 16
      %v1213 = vrot.slane %v1211, 5
      %v1214 = vsel %vm483, %v1209, %v1213
      %v1215 = vshrl.u32 %v1193, 16
      %v1217 = vrot.slane %v1215, 4
      %v1218 = vor.u32 %v1217, %v1213
      %v1219 = vrot.slane %v1218, 4
      %v1221 = vshll.u32 %v1194, 16
      %v1223 = vrot.slane %v1221, 5
      %v1224 = vsel %vm483, %v1219, %v1223
      %v1225 = vshrl.u32 %v1194, 16
      %v1227 = vrot.slane %v1225, 4
      %v1228 = vor.u32 %v1227, %v1223
      %v1229 = vrot.slane %v1228, 4
      %v1231 = vshll.u32 %v1195, 16
      %v1233 = vrot.slane %v1231, 5
      %v1234 = vsel %vm483, %v1229, %v1233
      %v1235 = vshrl.u32 %v1195, 16
      %v1237 = vrot.slane %v1235, 4
      %v1238 = vor.u32 %v1237, %v1233
      %v1239 = vrot.slane %v1238, 4
      %v1241 = vshll.u32 %v1196, 16
      %v1243 = vrot.slane %v1241, 5
      %v1244 = vsel %vm483, %v1239, %v1243
      %v1245 = vshrl.u32 %v1196, 16
      %v1247 = vrot.slane %v1245, 4
      %v1248 = vor.u32 %v1247, %v1243
      %v1249 = vrot.slane %v1248, 4
      %v1251 = vshll.u32 %v1197, 16
      %v1253 = vrot.slane %v1251, 5
      %v1254 = vsel %vm483, %v1249, %v1253
      %v1255 = vshrl.u32 %v1197, 16
      %v1257 = vrot.slane %v1255, 4
      %v1258 = vor.u32 %v1257, %v1253
      %v1259 = vrot.slane %v1258, 4
      %v1261 = vshll.u32 %v1198, 16
      %v1263 = vrot.slane %v1261, 5
      %v1264 = vsel %vm483, %v1259, %v1263
      %v1265 = vshrl.u32 %v1198, 16
      %v1267 = vrot.slane %v1265, 4
      %v1268 = vor.u32 %v1267, %v1263
      %v1269 = vrot.slane %v1268, 4
      %v1271 = vshll.u32 %v1199, 16
      %v1273 = vrot.slane %v1271, 5
      %v1274 = vsel %vm483, %v1269, %v1273
      %v1275 = vshrl.u32 %v1199, 16
      %v1277 = vrot.slane %v1275, 4
      %v1278 = vor.u32 %v1277, %v1273
      %v1279 = vrot.slane %v1278, 4
      %v1281 = vshll.u32 %v1200, 16
      %v1283 = vrot.slane %v1281, 5
      %v1284 = vsel %vm483, %v1279, %v1283
      %1285 = vrot.lane.b32.xlu0 %v1214, 96
      %v1286 = vpop.permute.xlu0 %1285
      %1287 = vrot.lane.b32.xlu0 %v1224, 96
      %v1288 = vpop.permute.xlu0 %1287
      %1289 = vrot.lane.b32.xlu0 %v1234, 96
      %v1290 = vpop.permute.xlu0 %1289
      %1291 = vrot.lane.b32.xlu0 %v1244, 96
      %v1292 = vpop.permute.xlu0 %1291
      %1293 = vrot.lane.b32.xlu0 %v1254, 96
      %v1294 = vpop.permute.xlu0 %1293
      %1295 = vrot.lane.b32.xlu0 %v1264, 96
      %v1296 = vpop.permute.xlu0 %1295
      %1297 = vrot.lane.b32.xlu0 %v1274, 96
      %v1298 = vpop.permute.xlu0 %1297
      %1299 = vrot.lane.b32.xlu0 %v1284, 96
      %v1300 = vpop.permute.xlu0 %1299
      %1309 = vst.msk [vmem:[#allocation3 + $0x4] sm:$0xf] %vm836, %v1286
      %1310 = vst.msk [vmem:[#allocation3 + $0x10] sm:$0xf] %vm836, %v1288
      %1311 = vst.msk [vmem:[#allocation3 + $0x1c] sm:$0xf] %vm836, %v1290
      %1312 = vst.msk [vmem:[#allocation3 + $0x28] sm:$0xf] %vm836, %v1292
      %1313 = vst.msk [vmem:[#allocation3 + $0x34] sm:$0xf] %vm836, %v1294
      %1314 = vst.msk [vmem:[#allocation3 + $0x40] sm:$0xf] %vm836, %v1296
      %1315 = vst.msk [vmem:[#allocation3 + $0x4c] sm:$0xf] %vm836, %v1298
      %1316 = vst.msk [vmem:[#allocation3 + $0x58] sm:$0xf] %vm836, %v1300
      %v1317 = vld [vmem:[#allocation2 + $0x8] sm:$0xe]
      %v1318 = vld [vmem:[#allocation2 + $0xc] sm:$0xf]
      %v1319 = vld [vmem:[#allocation2 + $0x10] sm:$0xf]
      %v1320 = vld [vmem:[#allocation2 + $0x14] sm:$0xf]
      %v1321 = vld [vmem:[#allocation2 + $0x18] sm:$0xf]
      %v1322 = vld [vmem:[#allocation2 + $0x1c] sm:$0xf]
      %v1323 = vld [vmem:[#allocation2 + $0x20] sm:$0xf]
      %v1324 = vld [vmem:[#allocation2 + $0x24] sm:$0xf]
      %v1325 = vld [vmem:[#allocation2 + $0x28] sm:$0x1]
      %v1326 = vld [vmem:[%s3] sm:$0xf]
      %v1327 = vld [vmem:[%s3 + $0x4] sm:$0xf]
      %v1328 = vld [vmem:[%s3 + $0x8] sm:$0xf]
      %v1329 = vld [vmem:[%s3 + $0xc] sm:$0xf]
      %v1330 = vld [vmem:[%s3 + $0x10] sm:$0xf]
      %v1331 = vld [vmem:[%s3 + $0x14] sm:$0xf]
      %v1332 = vld [vmem:[%s3 + $0x18] sm:$0xf]
      %v1333 = vld [vmem:[%s3 + $0x1c] sm:$0xf]
      %v1334 = vunpack.c.l.bf16 %v1317
      %v1335 = vunpack.c.l.bf16 %v1318
      %v1336 = vunpack.c.l.bf16 %v1319
      %v1337 = vunpack.c.l.bf16 %v1320
      %v1338 = vunpack.c.l.bf16 %v1321
      %v1339 = vunpack.c.l.bf16 %v1322
      %v1340 = vunpack.c.l.bf16 %v1323
      %v1341 = vunpack.c.l.bf16 %v1324
      %v1342 = vunpack.c.l.bf16 %v1325
      %v1343 = vunpack.c.l.bf16 %v1326
      %v1344 = vunpack.c.l.bf16 %v1327
      %v1345 = vunpack.c.l.bf16 %v1328
      %v1346 = vunpack.c.l.bf16 %v1329
      %v1347 = vunpack.c.l.bf16 %v1330
      %v1348 = vunpack.c.l.bf16 %v1331
      %v1349 = vunpack.c.l.bf16 %v1332
      %v1350 = vunpack.c.l.bf16 %v1333
      %v1359 = vrot.slane %v1343, 6
      %v1360 = vrot.slane %v1344, 6
      %v1361 = vsel %vm643, %v1359, %v1360
      %v1362 = vrot.slane %v1345, 6
      %v1363 = vsel %vm643, %v1360, %v1362
      %v1364 = vrot.slane %v1346, 6
      %v1365 = vsel %vm643, %v1362, %v1364
      %v1366 = vrot.slane %v1347, 6
      %v1367 = vsel %vm643, %v1364, %v1366
      %v1368 = vrot.slane %v1348, 6
      %v1369 = vsel %vm643, %v1366, %v1368
      %v1370 = vrot.slane %v1349, 6
      %v1371 = vsel %vm643, %v1368, %v1370
      %v1372 = vrot.slane %v1350, 6
      %v1373 = vsel %vm643, %v1370, %v1372
      %v1383 = vmul.f32 %v1334, %v1359
      %v1384 = vmul.f32 %v1335, %v1361
      %v1385 = vmul.f32 %v1336, %v1363
      %v1386 = vmul.f32 %v1337, %v1365
      %v1387 = vmul.f32 %v1338, %v1367
      %v1388 = vmul.f32 %v1339, %v1369
      %v1389 = vmul.f32 %v1340, %v1371
      %v1390 = vmul.f32 %v1341, %v1373
      %v1391 = vmul.f32 %v1342, %v1372
      %v1392 = vpack.c.bf16 %v1383, %v1383
      %v1393 = vpack.c.bf16 %v1384, %v1384
      %v1394 = vpack.c.bf16 %v1385, %v1385
      %v1395 = vpack.c.bf16 %v1386, %v1386
      %v1396 = vpack.c.bf16 %v1387, %v1387
      %v1397 = vpack.c.bf16 %v1388, %v1388
      %v1398 = vpack.c.bf16 %v1389, %v1389
      %v1399 = vpack.c.bf16 %v1390, %v1390
      %v1400 = vpack.c.bf16 %v1391, %v1391
      %v1410 = vrot.slane %v1392, 5
      %v1411 = vrot.slane %v1410, 4
      %v1412 = vrot.slane %v1393, 5
      %v1413 = vsel %vm697, %v1411, %v1412
      %v1414 = vrot.slane %v1412, 4
      %v1415 = vrot.slane %v1394, 5
      %v1416 = vsel %vm697, %v1414, %v1415
      %v1417 = vrot.slane %v1415, 4
      %v1418 = vrot.slane %v1395, 5
      %v1419 = vsel %vm697, %v1417, %v1418
      %v1420 = vrot.slane %v1418, 4
      %v1421 = vrot.slane %v1396, 5
      %v1422 = vsel %vm697, %v1420, %v1421
      %v1423 = vrot.slane %v1421, 4
      %v1424 = vrot.slane %v1397, 5
      %v1425 = vsel %vm697, %v1423, %v1424
      %v1426 = vrot.slane %v1424, 4
      %v1427 = vrot.slane %v1398, 5
      %v1428 = vsel %vm697, %v1426, %v1427
      %v1429 = vrot.slane %v1427, 4
      %v1430 = vrot.slane %v1399, 5
      %v1431 = vsel %vm697, %v1429, %v1430
      %v1432 = vrot.slane %v1430, 4
      %v1433 = vrot.slane %v1400, 5
      %v1434 = vsel %vm697, %v1432, %v1433
      %1443 = vst.msk [vmem:[#allocation3 + $0x8] sm:$0xf] %vm338, %v1413
      %1444 = vst.msk [vmem:[#allocation3 + $0x14] sm:$0xf] %vm338, %v1416
      %1445 = vst.msk [vmem:[#allocation3 + $0x20] sm:$0xf] %vm338, %v1419
      %1446 = vst.msk [vmem:[#allocation3 + $0x2c] sm:$0xf] %vm338, %v1422
      %1447 = vst.msk [vmem:[#allocation3 + $0x38] sm:$0xf] %vm338, %v1425
      %1448 = vst.msk [vmem:[#allocation3 + $0x44] sm:$0xf] %vm338, %v1428
      %1449 = vst.msk [vmem:[#allocation3 + $0x50] sm:$0xf] %vm338, %v1431
      %1450 = vst.msk [vmem:[#allocation3 + $0x5c] sm:$0xf] %vm338, %v1434
      %v1451 = vld [vmem:[#allocation3] sm:$0xff]
      %v1452 = vld [vmem:[#allocation3 + $0x8] sm:$0xf]
      %v1453 = vld [vmem:[#allocation3 + $0xc] sm:$0xff]
      %v1454 = vld [vmem:[#allocation3 + $0x14] sm:$0xf]
      %v1455 = vld [vmem:[#allocation3 + $0x18] sm:$0xff]
      %v1456 = vld [vmem:[#allocation3 + $0x20] sm:$0xf]
      %v1457 = vld [vmem:[#allocation3 + $0x24] sm:$0xff]
      %v1458 = vld [vmem:[#allocation3 + $0x2c] sm:$0xf]
      %v1459 = vld [vmem:[#allocation3 + $0x30] sm:$0xff]
      %v1460 = vld [vmem:[#allocation3 + $0x38] sm:$0xf]
      %v1461 = vld [vmem:[#allocation3 + $0x3c] sm:$0xff]
      %v1462 = vld [vmem:[#allocation3 + $0x44] sm:$0xf]
      %v1463 = vld [vmem:[#allocation3 + $0x48] sm:$0xff]
      %v1464 = vld [vmem:[#allocation3 + $0x50] sm:$0xf]
      %v1465 = vld [vmem:[#allocation3 + $0x54] sm:$0xff]
      %v1466 = vld [vmem:[#allocation3 + $0x5c] sm:$0xf]
      %v1467 = vld [vmem:[%s1] sm:$0xf]
      %v1468 = vld [vmem:[%s1 + $0x4] sm:$0xf]
      %v1469 = vld [vmem:[%s1 + $0x8] sm:$0xf]
      %v1470 = vld [vmem:[%s1 + $0xc] sm:$0xf]
      %v1471 = vld [vmem:[%s1 + $0x10] sm:$0xf]
      %v1472 = vld [vmem:[%s1 + $0x14] sm:$0xf]
      %v1473 = vld [vmem:[%s1 + $0x18] sm:$0xf]
      %v1474 = vld [vmem:[%s1 + $0x1c] sm:$0xf]
      %v1475 = vld [vmem:[%s1 + $0x20] sm:$0xf]
      %v1476 = vld [vmem:[%s1 + $0x24] sm:$0xf]
      %v1477 = vld [vmem:[%s1 + $0x28] sm:$0xf]
      %v1478 = vld [vmem:[%s1 + $0x2c] sm:$0xf]
      %v1479 = vld [vmem:[%s1 + $0x30] sm:$0xf]
      %v1480 = vld [vmem:[%s1 + $0x34] sm:$0xf]
      %v1481 = vld [vmem:[%s1 + $0x38] sm:$0xf]
      %v1482 = vld [vmem:[%s1 + $0x3c] sm:$0xf]
      %v1483 = vld [vmem:[%s1 + $0x40] sm:$0xf]
      %v1484 = vld [vmem:[%s1 + $0x44] sm:$0xf]
      %v1485 = vld [vmem:[%s1 + $0x48] sm:$0xf]
      %v1486 = vld [vmem:[%s1 + $0x4c] sm:$0xf]
      %v1487 = vld [vmem:[%s1 + $0x50] sm:$0xf]
      %v1488 = vld [vmem:[%s1 + $0x54] sm:$0xf]
      %v1489 = vld [vmem:[%s1 + $0x58] sm:$0xf]
      %v1490 = vld [vmem:[%s1 + $0x5c] sm:$0xf]
      %v1491 = vld [vmem:[%s1 + $0x60] sm:$0xf]
      %v1492 = vld [vmem:[%s1 + $0x64] sm:$0xf]
      %v1493 = vld [vmem:[%s1 + $0x68] sm:$0xf]
      %v1494 = vld [vmem:[%s1 + $0x6c] sm:$0xf]
      %v1495 = vld [vmem:[%s1 + $0x70] sm:$0xf]
      %v1496 = vld [vmem:[%s1 + $0x74] sm:$0xf]
      %v1497 = vld [vmem:[%s1 + $0x78] sm:$0xf]
      %v1498 = vld [vmem:[%s1 + $0x7c] sm:$0xf]
      %v1499 = vld [vmem:[%s1 + $0x80] sm:$0xf]
      %v1500 = vld [vmem:[%s1 + $0x84] sm:$0xf]
      %v1501 = vld [vmem:[%s1 + $0x88] sm:$0xf]
      %v1502 = vld [vmem:[%s1 + $0x8c] sm:$0xf]
      %v1519 = vunpack.c.l.b16 %v1451
      %v1520 = vunpack.c.h.b16 %v1451
      %v1521 = vunpack.c.l.b16 %v1452
      %v1522 = vunpack.c.l.b16 %v1453
      %v1523 = vunpack.c.h.b16 %v1453
      %v1524 = vunpack.c.l.b16 %v1454
      %v1525 = vunpack.c.l.b16 %v1455
      %v1526 = vunpack.c.h.b16 %v1455
      %v1527 = vunpack.c.l.b16 %v1456
      %v1528 = vunpack.c.l.b16 %v1457
      %v1529 = vunpack.c.h.b16 %v1457
      %v1530 = vunpack.c.l.b16 %v1458
      %v1531 = vunpack.c.l.b16 %v1459
      %v1532 = vunpack.c.h.b16 %v1459
      %v1533 = vunpack.c.l.b16 %v1460
      %v1534 = vunpack.c.l.b16 %v1461
      %v1535 = vunpack.c.h.b16 %v1461
      %v1536 = vunpack.c.l.b16 %v1462
      %v1537 = vunpack.c.l.b16 %v1463
      %v1538 = vunpack.c.h.b16 %v1463
      %v1539 = vunpack.c.l.b16 %v1464
      %v1540 = vunpack.c.l.b16 %v1465
      %v1541 = vunpack.c.h.b16 %v1465
      %v1542 = vunpack.c.l.b16 %v1466
      %v1543 = vpack.c.b16 %v1522, %v1519
      %v1544 = vpack.c.b16 %v1523, %v1520
      %v1545 = vpack.c.b16 %v1524, %v1521
      %v1546 = vpack.c.b16 %v1528, %v1525
      %v1547 = vpack.c.b16 %v1529, %v1526
      %v1548 = vpack.c.b16 %v1530, %v1527
      %v1549 = vpack.c.b16 %v1534, %v1531
      %v1550 = vpack.c.b16 %v1535, %v1532
      %v1551 = vpack.c.b16 %v1536, %v1533
      %v1552 = vpack.c.b16 %v1540, %v1537
      %v1553 = vpack.c.b16 %v1541, %v1538
      %v1554 = vpack.c.b16 %v1542, %v1539
      %v1599 = vunpack.c.l.b16 %v1467
      %v1600 = vunpack.c.l.b16 %v1468
      %v1601 = vunpack.c.l.b16 %v1469
      %v1602 = vunpack.c.l.b16 %v1470
      %v1603 = vunpack.c.l.b16 %v1471
      %v1604 = vunpack.c.l.b16 %v1472
      %v1605 = vunpack.c.l.b16 %v1473
      %v1606 = vunpack.c.l.b16 %v1474
      %v1607 = vunpack.c.l.b16 %v1475
      %v1608 = vunpack.c.l.b16 %v1476
      %v1609 = vunpack.c.l.b16 %v1477
      %v1610 = vunpack.c.l.b16 %v1478
      %v1611 = vunpack.c.l.b16 %v1479
      %v1612 = vunpack.c.l.b16 %v1480
      %v1613 = vunpack.c.l.b16 %v1481
      %v1614 = vunpack.c.l.b16 %v1482
      %v1615 = vunpack.c.l.b16 %v1483
      %v1616 = vunpack.c.l.b16 %v1484
      %v1617 = vunpack.c.l.b16 %v1485
      %v1618 = vunpack.c.l.b16 %v1486
      %v1619 = vunpack.c.l.b16 %v1487
      %v1620 = vunpack.c.l.b16 %v1488
      %v1621 = vunpack.c.l.b16 %v1489
      %v1622 = vunpack.c.l.b16 %v1490
      %v1623 = vunpack.c.l.b16 %v1491
      %v1624 = vunpack.c.l.b16 %v1492
      %v1625 = vunpack.c.l.b16 %v1493
      %v1626 = vunpack.c.l.b16 %v1494
      %v1627 = vunpack.c.l.b16 %v1495
      %v1628 = vunpack.c.l.b16 %v1496
      %v1629 = vunpack.c.l.b16 %v1497
      %v1630 = vunpack.c.l.b16 %v1498
      %v1631 = vunpack.c.l.b16 %v1499
      %v1632 = vunpack.c.l.b16 %v1500
      %v1633 = vunpack.c.l.b16 %v1501
      %v1634 = vunpack.c.l.b16 %v1502
      %v1635 = vpack.c.b16 %v1600, %v1599
      %v1636 = vpack.c.b16 %v1602, %v1601
      %v1637 = vpack.c.b16 %v1604, %v1603
      %v1638 = vpack.c.b16 %v1606, %v1605
      %v1639 = vpack.c.b16 %v1608, %v1607
      %v1640 = vpack.c.b16 %v1610, %v1609
      %v1641 = vpack.c.b16 %v1612, %v1611
      %v1642 = vpack.c.b16 %v1614, %v1613
      %v1643 = vpack.c.b16 %v1616, %v1615
      %v1644 = vpack.c.b16 %v1618, %v1617
      %v1645 = vpack.c.b16 %v1620, %v1619
      %v1646 = vpack.c.b16 %v1622, %v1621
      %v1647 = vpack.c.b16 %v1624, %v1623
      %v1648 = vpack.c.b16 %v1626, %v1625
      %v1649 = vpack.c.b16 %v1628, %v1627
      %v1650 = vpack.c.b16 %v1630, %v1629
      %v1651 = vpack.c.b16 %v1632, %v1631
      %v1652 = vpack.c.b16 %v1634, %v1633
      %vm1671 = vcmask 261120
      %v1673 = vsel %vm1671, %v1545, 0
      %v1676 = vsel %vm1671, %v1548, 0
      %v1679 = vsel %vm1671, %v1551, 0
      %v1682 = vsel %vm1671, %v1554, 0
      %1684 = vmatpush.bf16.msra.mxu0 %v1642
      %1685 = vmatpush.bf16.msra.mxu0 %v1641
      %1686 = vmatpush.bf16.msra.mxu0 %v1640
      %1687 = vmatpush.bf16.msra.mxu0 %v1639
      %1688 = vmatpush.bf16.msra.mxu0 %v1638
      %1689 = vmatpush.bf16.msra.mxu0 %v1637
      %1690 = vmatpush.bf16.msra.mxu0 %v1636
      %1691 = vmatpush.bf16.msra.mxu0 %v1635
      %1692 = vmatmul.bf16.gmra.mxu0 %v1543
      %v1693 = vpop.f32.mrf.mxu0
      %v1694 = vadd.f32 0.0, %v1693
      %v1695 = vpop.f32.mrf.mxu0
      %v1696 = vadd.f32 0.0, %v1695
      %1697 = vmatmul.bf16.gmra.mxu0 %v1546
      %v1698 = vpop.f32.mrf.mxu0
      %v1699 = vadd.f32 0.0, %v1698
      %v1700 = vpop.f32.mrf.mxu0
      %v1701 = vadd.f32 0.0, %v1700
      %1702 = vmatmul.bf16.gmra.mxu0 %v1549
      %v1703 = vpop.f32.mrf.mxu0
      %v1704 = vadd.f32 0.0, %v1703
      %v1705 = vpop.f32.mrf.mxu0
      %v1706 = vadd.f32 0.0, %v1705
      %1707 = vmatmul.bf16.gmra.mxu0 %v1552
      %v1708 = vpop.f32.mrf.mxu0
      %v1709 = vadd.f32 0.0, %v1708
      %v1710 = vpop.f32.mrf.mxu0
      %v1711 = vadd.f32 0.0, %v1710
      %1712 = vdwg.mxu0
      %1713 = vmatpush.bf16.msra.mxu0 %v1650
      %1714 = vmatpush.bf16.msra.mxu0 %v1649
      %1715 = vmatpush.bf16.msra.mxu0 %v1648
      %1716 = vmatpush.bf16.msra.mxu0 %v1647
      %1717 = vmatpush.bf16.msra.mxu0 %v1646
      %1718 = vmatpush.bf16.msra.mxu0 %v1645
      %1719 = vmatpush.bf16.msra.mxu0 %v1644
      %1720 = vmatpush.bf16.msra.mxu0 %v1643
      %1721 = vmatmul.bf16.gmra.mxu0 %v1544
      %v1722 = vpop.f32.mrf.mxu0
      %v1723 = vadd.f32 %v1694, %v1722
      %v1724 = vpop.f32.mrf.mxu0
      %v1725 = vadd.f32 %v1696, %v1724
      %1726 = vmatmul.bf16.gmra.mxu0 %v1547
      %v1727 = vpop.f32.mrf.mxu0
      %v1728 = vadd.f32 %v1699, %v1727
      %v1729 = vpop.f32.mrf.mxu0
      %v1730 = vadd.f32 %v1701, %v1729
      %1731 = vmatmul.bf16.gmra.mxu0 %v1550
      %v1732 = vpop.f32.mrf.mxu0
      %v1733 = vadd.f32 %v1704, %v1732
      %v1734 = vpop.f32.mrf.mxu0
      %v1735 = vadd.f32 %v1706, %v1734
      %1736 = vmatmul.bf16.gmra.mxu0 %v1553
      %v1737 = vpop.f32.mrf.mxu0
      %v1738 = vadd.f32 %v1709, %v1737
      %v1739 = vpop.f32.mrf.mxu0
      %v1740 = vadd.f32 %v1711, %v1739
      %1741 = vdwg.mxu0
      %1742 = vmatpush.bf16.msra.mxu0 0
      %1743 = vmatpush.bf16.msra.mxu0 0
      %1744 = vmatpush.bf16.msra.mxu0 0
      %1745 = vmatpush.bf16.msra.mxu0 0
      %1746 = vmatpush.bf16.msra.mxu0 0
      %1747 = vmatpush.bf16.msra.mxu0 0
      %1748 = vmatpush.bf16.msra.mxu0 %v1652
      %1749 = vmatpush.bf16.msra.mxu0 %v1651
      %1750 = vmatmul.bf16.gmra.mxu0 %v1673
      %v1751 = vpop.f32.mrf.mxu0
      %v1752 = vadd.f32 %v1723, %v1751
      %v1753 = vpop.f32.mrf.mxu0
      %v1754 = vadd.f32 %v1725, %v1753
      %1755 = vmatmul.bf16.gmra.mxu0 %v1676
      %v1756 = vpop.f32.mrf.mxu0
      %v1757 = vadd.f32 %v1728, %v1756
      %v1758 = vpop.f32.mrf.mxu0
      %v1759 = vadd.f32 %v1730, %v1758
      %1760 = vmatmul.bf16.gmra.mxu0 %v1679
      %v1761 = vpop.f32.mrf.mxu0
      %v1762 = vadd.f32 %v1733, %v1761
      %v1763 = vpop.f32.mrf.mxu0
      %v1764 = vadd.f32 %v1735, %v1763
      %1765 = vmatmul.bf16.gmra.mxu0 %v1682
      %v1766 = vpop.f32.mrf.mxu0
      %v1767 = vadd.f32 %v1738, %v1766
      %v1768 = vpop.f32.mrf.mxu0
      %v1769 = vadd.f32 %v1740, %v1768
      %1770 = vdwg.mxu0
      %1771 = vst [vmem:[%s219] sm:$0xff] %v1752
      %1772 = vst [vmem:[%s219 + $0x8] sm:$0xff] %v1754
      %1773 = vst [vmem:[%s219 + $0x10] sm:$0xff] %v1757
      %1774 = vst [vmem:[%s219 + $0x18] sm:$0xff] %v1759
      %1775 = vst [vmem:[%s219 + $0x20] sm:$0xff] %v1762
      %1776 = vst [vmem:[%s219 + $0x28] sm:$0xff] %v1764
      %1777 = vst [vmem:[%s219 + $0x30] sm:$0xff] %v1767
      %1778 = vst [vmem:[%s219 + $0x38] sm:$0xff] %v1769
      %s1779 = smul.u32 8, %s20
      %p1780 = scmp.lt.s32.totalorder %s19, 1
      %s1781 = scalar_select %p1780, %s19, 1
      %p1782 = scmp.lt.s32.totalorder %s1779, 7
      %s1783 = scalar_select %p1782, %s1779, 7
      %s1784 = smul.addr %s1781, 8
      %s1785 = sadd.s32 %s1783, %s1784
      %s1786 = smul.addr %s1785, 8
      %s1787 = scalar_lea.vmem %s4, %s1786
      // Predicated region
      $region53: #{upsample_1.1} parent=35 // pred_check
        %p1788 = pneg %p136
      $region54: #{upsample_1.1} parent=35 // pred_check_branch
        %1790 = sbr.rel (%p1788) target = $region56
      $region55: #{upsample_1.1} parent=35 // pred_region
        %s1791 = smul.u32 8, %s20
      $region56: #{upsample_1.1} parent=35 // pred_fallthru
        _
    $region36: #{upsample_1.1} parent=5 // pred_fallthru
      _
    %p1792 = scmp.le.s32.totalorder 2, %s10
    // Predicated region
    $region57: #{upsample_1.1} parent=5 // pred_check
      %p1793 = pneg %p1792
    $region58: #{upsample_1.1} parent=5 // pred_check_branch
      %1795 = sbr.rel (%p1793) target = $region60
    $region59: #{upsample_1.1} parent=5 // pred_region
      %s1796 = ssub.s32 %s10, 2
      // Predicated region
      $region61: #{upsample_1.1} parent=59 // pred_check
        %p1797 = pneg %p142
      $region62: #{upsample_1.1} parent=59 // pred_check_branch
        %1799 = sbr.rel (%p1797) target = $region64
      $region63: #{upsample_1.1} parent=59 // pred_region
        %s1800 = smul.u32 8, %s22
        %p1801 = scmp.lt.s32.totalorder %s21, 1
        %s1802 = scalar_select %p1801, %s21, 1
        %p1803 = scmp.lt.s32.totalorder %s1800, 7
        %s1804 = scalar_select %p1803, %s1800, 7
        %s1805 = smul.addr %s1802, 8
        %s1806 = sadd.s32 %s1804, %s1805
        %s1807 = smul.addr %s1806, 8
        %s1808 = scalar_lea.vmem %s4, %s1807
      $region64: #{upsample_1.1} parent=59 // pred_fallthru
        _
    $region60: #{upsample_1.1} parent=5 // pred_fallthru
      _
  $region6: #{upsample_1.1} parent=0 // loop_footer
    %s14 = sadd.s32 1, %s10
  $region7: #{upsample_1.1} parent=0 // loop_footer_branch
    %9 = sbr.rel target = $region3
  $region8: #{upsample_1.1} parent=0 // loop_exit
    _

</llo_original>
